<compile_context>
chip_gen: v7x
topology: tpu7x:2x2x1
jax: 0.10.0
libtpu: 0.0.40
codegen_flags: <defaults>
</compile_context>

<pallas_src>
import functools
import math

import jax
import jax.numpy as jnp
from jax import lax
from jax.experimental import pallas as pl
from jax.experimental.pallas import tpu as pltpu


def _round_up(n, m):
    return ((n + m - 1) // m) * m


def _choose_tile(n, preferred, align=128):
    """Pick a lane/MXU-friendly tile: multiple of `align`, <= max(preferred, align),
    minimizing padding for ceil(n / tile) tiles."""
    preferred = max(align, _round_up(preferred, align))
    num_tiles = -(-n // preferred)
    return _round_up(-(-n // num_tiles), align)


def _flash_attention_kernel(q_ref, k_ref, v_ref, o_ref,
                            qs_sc, m_sc, l_sc, acc_sc, *,
                            scale, compute_dtype, k_valid, block_k):
    """Online-softmax attention over one (batch, q_tile); K/V tiled on grid axis 2."""
    ki = pl.program_id(2)

    @pl.when(ki == 0)
    def _init():
        # Pre-scale (and pre-cast) Q once per (batch, q-tile).  The Q block is
        # resident in VMEM across the whole K axis, so this hoists tq*d VPU
        # multiplies + the bf16 cast out of every inner step.
        qs_sc[...] = (q_ref[0] * jnp.asarray(scale, q_ref.dtype)).astype(compute_dtype)
        m_sc[...] = jnp.full_like(m_sc, -jnp.inf)
        l_sc[...] = jnp.zeros_like(l_sc)
        acc_sc[...] = jnp.zeros_like(acc_sc)

    q = qs_sc[...]                          # (tq, d)  pre-scaled, compute dtype
    k = k_ref[0].astype(compute_dtype)      # (tk, d)
    v = v_ref[0].astype(compute_dtype)      # (tk, dv)

    # scores = (Q/sqrt(d)) @ K^T without materializing the transpose.
    s = lax.dot_general(q, k, (((1,), (1,)), ((), ())),
                        preferred_element_type=jnp.float32)      # (tq, tk) f32

    if k_valid is not None:
        # Keys were zero-padded to a 128-multiple tile: mask the padded columns.
        col = ki * block_k + lax.broadcasted_iota(jnp.int32, s.shape, 1)
        s = jnp.where(col < k_valid, s, -jnp.inf)

    m_prev = m_sc[...]                                           # (tq, 1)
    m_new = jnp.maximum(m_prev, jnp.max(s, axis=-1, keepdims=True))
    alpha = jnp.exp(m_prev - m_new)                              # rescale old stats
    # exp directly in the matmul dtype: halves EUP work in bf16 mode and feeds
    # the PV matmul with no separate cast pass.  Row sum accumulates in f32.
    p = jnp.exp((s - m_new).astype(compute_dtype))               # (tq, tk)

    l_sc[...] = alpha * l_sc[...] + jnp.sum(p.astype(jnp.float32),
                                            axis=-1, keepdims=True)
    acc_sc[...] = alpha * acc_sc[...] + lax.dot_general(
        p, v, (((1,), (0,)), ((), ())),
        preferred_element_type=jnp.float32)
    m_sc[...] = m_new

    @pl.when(ki == pl.num_programs(2) - 1)
    def _finalize():
        # Exact reciprocal for f32 outputs (runs once per tile, essentially free).
        approx = bool(o_ref.dtype != jnp.float32)
        inv_l = pl.reciprocal(l_sc[...], approx=approx)
        o_ref[0] = (acc_sc[...] * inv_l).astype(o_ref.dtype)


def dot_product_attention(queries, keys, values, valid_lens=None, dropout=0.0,
                          *, block_q=512, block_k=1024, use_bf16_matmul=True):
    """Scaled dot-product attention.

    queries: (B, Tq, d), keys: (B, Tk, d), values: (B, Tk, dv) -> (B, Tq, dv)
    """
    assert valid_lens is None, "masking via valid_lens not implemented in this kernel"
    del dropout  # nn.Dropout is identity in eval mode

    B, Tq, d = queries.shape
    Bk, Tk, dk = keys.shape
    Bv, Tkv, dv = values.shape
    assert B == Bk == Bv and Tk == Tkv and d == dk

    compute_dtype = jnp.bfloat16 if use_bf16_matmul else queries.dtype

    tq = _choose_tile(Tq, block_q)
    tk = _choose_tile(Tk, block_k)
    tq_pad = _round_up(Tq, tq)
    tk_pad = _round_up(Tk, tk)

    if tq_pad != Tq:  # padded query rows are sliced off the output
        queries = jnp.pad(queries, ((0, 0), (0, tq_pad - Tq), (0, 0)))
    if tk_pad != Tk:  # padded keys are masked with -inf inside the kernel
        keys = jnp.pad(keys, ((0, 0), (0, tk_pad - Tk), (0, 0)))
        values = jnp.pad(values, ((0, 0), (0, tk_pad - Tk), (0, 0)))

    grid = (B, tq_pad // tq, tk_pad // tk)

    kernel = functools.partial(
        _flash_attention_kernel,
        scale=1.0 / math.sqrt(d),
        compute_dtype=compute_dtype,
        k_valid=(Tk if tk_pad != Tk else None),
        block_k=tk,
    )

    out = pl.pallas_call(
        kernel,
        out_shape=jax.ShapeDtypeStruct((B, tq_pad, dv), queries.dtype),
        grid_spec=pltpu.PrefetchScalarGridSpec(
            num_scalar_prefetch=0,
            grid=grid,
            in_specs=[
                pl.BlockSpec((1, tq, d), lambda b, qi, ki: (b, qi, 0)),
                pl.BlockSpec((1, tk, d), lambda b, qi, ki: (b, ki, 0)),
                pl.BlockSpec((1, tk, dv), lambda b, qi, ki: (b, ki, 0)),
            ],
            out_specs=pl.BlockSpec((1, tq, dv), lambda b, qi, ki: (b, qi, 0)),
            scratch_shapes=[
                pltpu.VMEM((tq, d), compute_dtype),   # pre-scaled / pre-cast Q
                pltpu.VMEM((tq, 1), jnp.float32),     # running row max
                pltpu.VMEM((tq, 1), jnp.float32),     # running row sum
                pltpu.VMEM((tq, dv), jnp.float32),    # f32 output accumulator
            ],
        ),
        compiler_params=pltpu.CompilerParams(
            dimension_semantics=("parallel", "parallel", "arbitrary"),
            vmem_limit_bytes=32 * 1024 * 1024,   # modest; working set is a few MiB
        ),
    )(queries, keys, values)

    if tq_pad != Tq:
        out = out[:, :Tq, :]
    return out


def _reference(queries, keys, values):
    d = queries.shape[-1]
    scores = jnp.einsum("bqd,bkd->bqk", queries.astype(jnp.float32),
                        keys.astype(jnp.float32)) / math.sqrt(d)
    weights = jax.nn.softmax(scores, axis=-1)
    return jnp.einsum("bqk,bkv->bqv", weights, values.astype(jnp.float32))


if __name__ == "__main__":
    key = jax.random.PRNGKey(0)

    # --- Test 1: f32 exact-path, awkward (non-128-multiple) sequence lengths ---
    # Exercises: multi q-tile, multi k-tile online-softmax accumulation, Q row
    # padding, and K-tail padding+masking, with f32 MXU path and tight tolerance.
    kq, kk, kv, key = jax.random.split(key, 4)
    B, Tq, Tk, d, dv = 2, 192, 320, 64, 128
    q1 = jax.random.normal(kq, (B, Tq, d), dtype=jnp.float32)
    k1 = jax.random.normal(kk, (B, Tk, d), dtype=jnp.float32)
    v1 = jax.random.normal(kv, (B, Tk, dv), dtype=jnp.float32)

    out1 = dot_product_attention(q1, k1, v1, block_q=128, block_k=128,
                                 use_bf16_matmul=False)
    out1 = jax.block_until_ready(out1)
    ref1 = _reference(q1, k1, v1)
    assert out1.shape == (B, Tq, dv)
    err1 = float(jnp.max(jnp.abs(out1 - ref1)))
    assert jnp.allclose(out1, ref1, atol=2e-3, rtol=2e-3), f"f32 path mismatch: {err1}"

    # --- Test 2: bf16 fast path with default (large, lane-aligned) tiles ---
    kq, kk, kv, key = jax.random.split(key, 4)
    B2, Tq2, Tk2, d2, dv2 = 2, 256, 256, 128, 128
    q2 = jax.random.normal(kq, (B2, Tq2, d2), dtype=jnp.bfloat16)
    k2 = jax.random.normal(kk, (B2, Tk2, d2), dtype=jnp.bfloat16)
    v2 = jax.random.normal(kv, (B2, Tk2, dv2), dtype=jnp.bfloat16)

    out2 = dot_product_attention(q2, k2, v2)   # defaults: bf16 MXU, block_q=512/block_k=1024
    out2 = jax.block_until_ready(out2)
    ref2 = _reference(q2, k2, v2)
    assert out2.shape == (B2, Tq2, dv2)
    err2 = float(jnp.max(jnp.abs(out2.astype(jnp.float32) - ref2)))
    assert jnp.allclose(out2.astype(jnp.float32), ref2, atol=5e-2, rtol=5e-2), \
        f"bf16 path mismatch: {err2}"

    print("KERNEL_OK")
</pallas_src>

<mosaic_0001>
module attributes {stable_mosaic.version = 11 : i64} {
  func.func @_flash_attention_kernel(%arg0: i32, %arg1: i32, %arg2: i32, %arg3: memref<1x128x64xf32, #tpu.memory_space<vmem>>, %arg4: memref<1x128x64xf32, #tpu.memory_space<vmem>>, %arg5: memref<1x128x128xf32, #tpu.memory_space<vmem>>, %arg6: memref<1x128x128xf32, #tpu.memory_space<vmem>>, %arg7: memref<128x64xf32, #tpu.memory_space<vmem>>, %arg8: memref<128x1xf32, #tpu.memory_space<vmem>>, %arg9: memref<128x1xf32, #tpu.memory_space<vmem>>, %arg10: memref<128x128xf32, #tpu.memory_space<vmem>>) attributes {dimension_semantics = [#tpu.dimension_semantics<parallel>, #tpu.dimension_semantics<parallel>, #tpu.dimension_semantics<arbitrary>], iteration_bounds = array<i64: 2, 2, 3>, scalar_prefetch = 0 : i64, scratch_operands = 4 : i64, tpu.core_type = #tpu.core_type<tc>, window_params = [{transform_indices = @transform_0, window_bounds = array<i64: 1, 128, 64>}, {transform_indices = @transform_1, window_bounds = array<i64: 1, 128, 64>}, {transform_indices = @transform_2, window_bounds = array<i64: 1, 128, 128>}, {transform_indices = @transform_3, window_bounds = array<i64: 1, 128, 128>}]} {
    %c0_i32 = arith.constant 0 : i32
    %0 = arith.cmpi eq, %arg2, %c0_i32 : i32
    %1 = arith.extui %0 : i1 to i32
    %c0_i32_0 = arith.constant 0 : i32
    %2 = arith.cmpi ne, %1, %c0_i32_0 : i32
    scf.if %2 {
      %c0_25 = arith.constant 0 : index
      %c0_26 = arith.constant 0 : index
      %c0_27 = arith.constant 0 : index
      %42 = vector.load %arg3[%c0_25, %c0_26, %c0_27] : memref<1x128x64xf32, #tpu.memory_space<vmem>>, vector<1x128x64xf32>
      %43 = vector.shape_cast %42 : vector<1x128x64xf32> to vector<128x64xf32>
      %cst_28 = arith.constant 1.250000e-01 : f32
      %44 = vector.broadcast %cst_28 : f32 to vector<128x64xf32>
      %45 = arith.mulf %43, %44 : vector<128x64xf32>
      %c0_29 = arith.constant 0 : index
      %c0_30 = arith.constant 0 : index
      %46 = vector.load %arg7[%c0_29, %c0_30] : memref<128x64xf32, #tpu.memory_space<vmem>>, vector<128x64xf32>
      tpu.vector_store %arg7[%c0_29, %c0_30], %45 {strides = array<i32>} : memref<128x64xf32, #tpu.memory_space<vmem>>, vector<128x64xf32>,
      %cst_31 = arith.constant 0xFF800000 : f32
      %47 = vector.broadcast %cst_31 : f32 to vector<128x1xf32>
      %c0_32 = arith.constant 0 : index
      %c0_33 = arith.constant 0 : index
      %48 = vector.load %arg8[%c0_32, %c0_33] : memref<128x1xf32, #tpu.memory_space<vmem>>, vector<128x1xf32>
      tpu.vector_store %arg8[%c0_32, %c0_33], %47 {strides = array<i32>} : memref<128x1xf32, #tpu.memory_space<vmem>>, vector<128x1xf32>,
      %cst_34 = arith.constant 0.000000e+00 : f32
      %49 = vector.broadcast %cst_34 : f32 to vector<128x1xf32>
      %c0_35 = arith.constant 0 : index
      %c0_36 = arith.constant 0 : index
      %50 = vector.load %arg9[%c0_35, %c0_36] : memref<128x1xf32, #tpu.memory_space<vmem>>, vector<128x1xf32>
      tpu.vector_store %arg9[%c0_35, %c0_36], %49 {strides = array<i32>} : memref<128x1xf32, #tpu.memory_space<vmem>>, vector<128x1xf32>,
      %cst_37 = arith.constant 0.000000e+00 : f32
      %51 = vector.broadcast %cst_37 : f32 to vector<128x128xf32>
      %c0_38 = arith.constant 0 : index
      %c0_39 = arith.constant 0 : index
      %52 = vector.load %arg10[%c0_38, %c0_39] : memref<128x128xf32, #tpu.memory_space<vmem>>, vector<128x128xf32>
      tpu.vector_store %arg10[%c0_38, %c0_39], %51 {strides = array<i32>} : memref<128x128xf32, #tpu.memory_space<vmem>>, vector<128x128xf32>,
    } else {
    }
    %c0 = arith.constant 0 : index
    %c0_1 = arith.constant 0 : index
    %3 = vector.load %arg7[%c0, %c0_1] : memref<128x64xf32, #tpu.memory_space<vmem>>, vector<128x64xf32>
    %c0_2 = arith.constant 0 : index
    %c0_3 = arith.constant 0 : index
    %c0_4 = arith.constant 0 : index
    %4 = vector.load %arg4[%c0_2, %c0_3, %c0_4] : memref<1x128x64xf32, #tpu.memory_space<vmem>>, vector<1x128x64xf32>
    %5 = vector.shape_cast %4 : vector<1x128x64xf32> to vector<128x64xf32>
    %c0_5 = arith.constant 0 : index
    %c0_6 = arith.constant 0 : index
    %c0_7 = arith.constant 0 : index
    %6 = vector.load %arg5[%c0_5, %c0_6, %c0_7] : memref<1x128x128xf32, #tpu.memory_space<vmem>>, vector<1x128x128xf32>
    %7 = vector.shape_cast %6 : vector<1x128x128xf32> to vector<128x128xf32>
    %cst = arith.constant dense<0.000000e+00> : vector<128x128xf32>
    %8 = tpu.matmul %3, %5, %cst {dimension_numbers = #tpu.dot_dimension_numbers<[1], [1], [0], [0], [0, 0, 1, 0], [], []>} : vector<128x64xf32>, vector<128x64xf32>, vector<128x128xf32> -> vector<128x128xf32>
    %c128_i32 = arith.constant 128 : i32
    %9 = arith.muli %arg2, %c128_i32 : i32
    %10 = tpu.iota {dimensions = array<i32: 1>} : vector<128x128xi32>
    %11 = vector.broadcast %9 : i32 to vector<128x128xi32>
    %12 = arith.addi %11, %10 : vector<128x128xi32>
    %c320_i32 = arith.constant 320 : i32
    %13 = vector.broadcast %c320_i32 : i32 to vector<128x128xi32>
    %14 = arith.cmpi slt, %12, %13 : vector<128x128xi32>
    %cst_8 = arith.constant 0xFF800000 : f32
    %15 = vector.broadcast %cst_8 : f32 to vector<128x128xf32>
    %16 = arith.select %14, %8, %15 : vector<128x128xi1>, vector<128x128xf32>
    %c0_9 = arith.constant 0 : index
    %c0_10 = arith.constant 0 : index
    %17 = vector.load %arg8[%c0_9, %c0_10] : memref<128x1xf32, #tpu.memory_space<vmem>>, vector<128x1xf32>
    %cst_11 = arith.constant dense<0xFF800000> : vector<128xf32>
    %18 = vector.multi_reduction <maximumf>, %16, %cst_11 [1] : vector<128x128xf32> to vector<128xf32>
    %19 = vector.shape_cast %18 : vector<128xf32> to vector<128x1xf32>
    %20 = arith.maximumf %17, %19 : vector<128x1xf32>
    %21 = arith.subf %17, %20 : vector<128x1xf32>
    %22 = math.exp %21 : vector<128x1xf32>
    %23 = vector.broadcast %20 : vector<128x1xf32> to vector<128x128xf32>
    %24 = arith.subf %16, %23 : vector<128x128xf32>
    %25 = math.exp %24 : vector<128x128xf32>
    %c0_12 = arith.constant 0 : index
    %c0_13 = arith.constant 0 : index
    %26 = vector.load %arg9[%c0_12, %c0_13] : memref<128x1xf32, #tpu.memory_space<vmem>>, vector<128x1xf32>
    %27 = arith.mulf %22, %26 : vector<128x1xf32>
    %cst_14 = arith.constant dense<0.000000e+00> : vector<128xf32>
    %28 = vector.multi_reduction <add>, %25, %cst_14 [1] : vector<128x128xf32> to vector<128xf32>
    %29 = vector.shape_cast %28 : vector<128xf32> to vector<128x1xf32>
    %30 = arith.addf %27, %29 : vector<128x1xf32>
    %c0_15 = arith.constant 0 : index
    %c0_16 = arith.constant 0 : index
    %31 = vector.load %arg9[%c0_15, %c0_16] : memref<128x1xf32, #tpu.memory_space<vmem>>, vector<128x1xf32>
    tpu.vector_store %arg9[%c0_15, %c0_16], %30 {strides = array<i32>} : memref<128x1xf32, #tpu.memory_space<vmem>>, vector<128x1xf32>,
    %c0_17 = arith.constant 0 : index
    %c0_18 = arith.constant 0 : index
    %32 = vector.load %arg10[%c0_17, %c0_18] : memref<128x128xf32, #tpu.memory_space<vmem>>, vector<128x128xf32>
    %33 = vector.broadcast %22 : vector<128x1xf32> to vector<128x128xf32>
    %34 = arith.mulf %33, %32 : vector<128x128xf32>
    %cst_19 = arith.constant dense<0.000000e+00> : vector<128x128xf32>
    %35 = tpu.matmul %25, %7, %cst_19 {dimension_numbers = #tpu.dot_dimension_numbers<[1], [0], [0], [1], [0, 0, 1, 1], [], []>} : vector<128x128xf32>, vector<128x128xf32>, vector<128x128xf32> -> vector<128x128xf32>
    %36 = arith.addf %34, %35 : vector<128x128xf32>
    %c0_20 = arith.constant 0 : index
    %c0_21 = arith.constant 0 : index
    %37 = vector.load %arg10[%c0_20, %c0_21] : memref<128x128xf32, #tpu.memory_space<vmem>>, vector<128x128xf32>
    tpu.vector_store %arg10[%c0_20, %c0_21], %36 {strides = array<i32>} : memref<128x128xf32, #tpu.memory_space<vmem>>, vector<128x128xf32>,
    %c0_22 = arith.constant 0 : index
    %c0_23 = arith.constant 0 : index
    %38 = vector.load %arg8[%c0_22, %c0_23] : memref<128x1xf32, #tpu.memory_space<vmem>>, vector<128x1xf32>
    tpu.vector_store %arg8[%c0_22, %c0_23], %20 {strides = array<i32>} : memref<128x1xf32, #tpu.memory_space<vmem>>, vector<128x1xf32>,
    %c2_i32 = arith.constant 2 : i32
    %39 = arith.cmpi eq, %arg2, %c2_i32 : i32
    %40 = arith.extui %39 : i1 to i32
    %c0_i32_24 = arith.constant 0 : i32
    %41 = arith.cmpi ne, %40, %c0_i32_24 : i32
    scf.if %41 {
      %c0_25 = arith.constant 0 : index
      %c0_26 = arith.constant 0 : index
      %42 = vector.load %arg9[%c0_25, %c0_26] : memref<128x1xf32, #tpu.memory_space<vmem>>, vector<128x1xf32>
      %43 = tpu.reciprocal %42 : vector<128x1xf32> -> vector<128x1xf32>
      %c0_27 = arith.constant 0 : index
      %c0_28 = arith.constant 0 : index
      %44 = vector.load %arg10[%c0_27, %c0_28] : memref<128x128xf32, #tpu.memory_space<vmem>>, vector<128x128xf32>
      %45 = vector.broadcast %43 : vector<128x1xf32> to vector<128x128xf32>
      %46 = arith.mulf %44, %45 : vector<128x128xf32>
      %c0_29 = arith.constant 0 : index
      %c0_30 = arith.constant 0 : index
      %c0_31 = arith.constant 0 : index
      %47 = vector.load %arg6[%c0_29, %c0_30, %c0_31] : memref<1x128x128xf32, #tpu.memory_space<vmem>>, vector<1x128x128xf32>
      %48 = vector.shape_cast %47 : vector<1x128x128xf32> to vector<128x128xf32>
      %49 = vector.shape_cast %46 : vector<128x128xf32> to vector<1x128x128xf32>
      tpu.vector_store %arg6[%c0_29, %c0_30, %c0_31], %49 {strides = array<i32>} : memref<1x128x128xf32, #tpu.memory_space<vmem>>, vector<1x128x128xf32>,
    } else {
    }
    return
  }
  func.func @transform_0(%arg0: i32, %arg1: i32, %arg2: i32) -> (i32, i32, i32) {
    %c0_i32 = arith.constant 0 : i32
    %c0_i32_0 = arith.constant 0 : i32
    return %arg0, %arg1, %c0_i32 : i32, i32, i32
  }
  func.func @transform_1(%arg0: i32, %arg1: i32, %arg2: i32) -> (i32, i32, i32) {
    %c0_i32 = arith.constant 0 : i32
    %c0_i32_0 = arith.constant 0 : i32
    return %arg0, %arg2, %c0_i32 : i32, i32, i32
  }
  func.func @transform_2(%arg0: i32, %arg1: i32, %arg2: i32) -> (i32, i32, i32) {
    %c0_i32 = arith.constant 0 : i32
    %c0_i32_0 = arith.constant 0 : i32
    return %arg0, %arg2, %c0_i32 : i32, i32, i32
  }
  func.func @transform_3(%arg0: i32, %arg1: i32, %arg2: i32) -> (i32, i32, i32) {
    %c0_i32 = arith.constant 0 : i32
    %c0_i32_0 = arith.constant 0 : i32
    return %arg0, %arg1, %c0_i32 : i32, i32, i32
  }
}

</mosaic_0001>

<llo_original>
// kernel: tpu_custom_call.1
$region0: #{tpu_custom_call.1}
  #allocation0 [shape = 'u32[]', space=smem, size = 0x4, offset = 0x4, fixed_abs, tag = 'smem constant byte address 0x4 - core index']
  #allocation1 [shape = 'u32[144,128]{1,0:T(1,128)}', space=vmem, size = 0x12000, scoped, tag = 'internal scratch']
  #allocation2 [shape = 'f32[128,64]{1,0:T(8,128)}', space=vmem, size = 0x10000, scoped, tag = 'scratch operand']
  #allocation3 [shape = 'f32[128,1]{1,0:T(8,128)}', space=vmem, size = 0x10000, scoped, tag = 'scratch operand']
  #allocation4 [shape = 'f32[128,1]{1,0:T(8,128)}', space=vmem, size = 0x10000, scoped, tag = 'scratch operand']
  #allocation5 [shape = 'f32[128,128]{1,0:T(8,128)}', space=vmem, size = 0x10000, scoped, tag = 'scratch operand']
  %s0 = inlined_call_operand.vmem [shape: f32[2,256,64], index: 0, kind: input, shape index: {}]
  %s1 = inlined_call_operand.vmem [shape: f32[2,384,64], index: 1, kind: input, shape index: {}]
  %s2 = inlined_call_operand.vmem [shape: f32[2,384,128], index: 2, kind: input, shape index: {}]
  %s3 = inlined_call_operand.hbm [shape: f32[2,256,128], index: 3, kind: output, shape index: {}]
  %s4 = sld [smem:[#allocation0]]
  $region53: #{tpu_custom_call.1} parent=0
    _
  %s6 = ssub.s32 1, %s4
  %s7 = scalar_select 0, %s6, %s4
  $region1: #{tpu_custom_call.1} parent=0
    #allocation6 [shape = 'u8[131072]{0}', space=vmem, size = 0x20000, scoped, tag = 'output window, operand 0']
    #allocation7 [shape = 's32[2]{0}', space=sflag, size = 0x8, scoped, tag = 'scoped memory for tpu_custom_call.1']
    %8 = vsyncpa [#allocation7], 0
    %s9 = scalar_lea.sflag [#allocation7], 1
    %10 = vsyncpa %s9, 0
    loop: start=0, step=1, limit=14
    $region2: #{tpu_custom_call.1} parent=1 // loop_pre_header
      _
    $region3: #{tpu_custom_call.1} parent=1 // loop_header
      %s12 = sphi 0, %s16
      %p13 = scmp.ge.s32.totalorder %s12, 14
      %s19 = sphi 0, %s38
      %s20 = sphi 0, %s34
      %s21 = sphi 0, %s30
      %s22 = sphi 0, %s19
      %s23 = sphi 0, %s20
      %s24 = sphi 0, %s21
      %s25 = sphi 0, %s22
      %s26 = sphi 0, %s23
      %s27 = sphi 0, %s24
      %s43 = sphi 0, %s45
      %s46 = sphi 0, %s43
      %s47 = sphi 0, %s46
      %s63 = sphi 0, %s47
      %s71 = sphi 0, %s73
      %s74 = sphi 0, %s71
      %s75 = sphi 0, %s74
      %s91 = sphi 0, %s75
      %s99 = sphi 0, %s101
      %s102 = sphi 0, %s99
      %s103 = sphi 0, %s102
      %s119 = sphi 0, %s103
      %s127 = sphi 0, %s129
      %s130 = sphi 0, %s127
      %s131 = sphi 0, %s130
      %s147 = sphi 0, %s131
    $region4: #{tpu_custom_call.1} parent=1 // loop_header_branch
      %15 = sbr.rel (%p13) target = $region8
    $region5: #{tpu_custom_call.1} parent=1 // loop_body
      %s17 = ssub.s32 %s12, 1
      %s18 = ssub.s32 %s12, 2
      %s28 = sadd.s32 1, %s21
      %p29 = scmp.ge.s32.totalorder %s28, 3
      %s30 = scalar_select %p29, 0, %s28
      %s31 = sadd.s32 1, %s20
      %s32 = scalar_select %p29, %s31, %s20
      %p33 = scmp.ge.s32.totalorder %s32, 2
      %s34 = scalar_select %p33, 0, %s32
      %s35 = sadd.s32 1, %s19
      %s36 = scalar_select %p33, %s35, %s19
      %p37 = scmp.ge.s32.totalorder %s36, 2
      %s38 = scalar_select %p37, 0, %s36
      %s39 = ssub.s32 %s19, %s38
      %s40 = ssub.s32 %s20, %s34
      %s41 = sor.u32 %s39, %s40
      %p42 = scmp.eq.s32.totalorder %s41, 0
      %s44 = sadd.s32 %s43, 1
      %s45 = scalar_select %p42, %s43, %s44
      %p48 = pneg %p42
      %p49 = scmp.eq.s32.totalorder %s12, 11
      %p50 = por %p48, %p49
      %p51 = scmp.ne.s32.totalorder %s43, %s46
      %p52 = scmp.eq.s32.totalorder %s12, 0
      %p53 = por %p51, %p52
      %p54 = scmp.ne.s32.totalorder %s43, %s46
      %p55 = scmp.eq.s32.totalorder %s17, 11
      %p56 = por %p54, %p55
      %p57 = scmp.ne.s32.totalorder %s46, %s47
      %p58 = scmp.eq.s32.totalorder %s17, 0
      %p59 = por %p57, %p58
      %p60 = scmp.ne.s32.totalorder %s46, %s47
      %p61 = scmp.eq.s32.totalorder %s18, 11
      %p62 = por %p60, %p61
      %p64 = scmp.ne.s32.totalorder %s47, %s63
      %p65 = scmp.eq.s32.totalorder %s18, 0
      %p66 = por %p64, %p65
      %s67 = ssub.s32 %s19, %s38
      %s68 = ssub.s32 %s21, %s30
      %s69 = sor.u32 %s67, %s68
      %p70 = scmp.eq.s32.totalorder %s69, 0
      %s72 = sadd.s32 %s71, 1
      %s73 = scalar_select %p70, %s71, %s72
      %p76 = pneg %p70
      %p77 = scmp.eq.s32.totalorder %s12, 11
      %p78 = por %p76, %p77
      %p79 = scmp.ne.s32.totalorder %s71, %s74
      %p80 = scmp.eq.s32.totalorder %s12, 0
      %p81 = por %p79, %p80
      %p82 = scmp.ne.s32.totalorder %s71, %s74
      %p83 = scmp.eq.s32.totalorder %s17, 11
      %p84 = por %p82, %p83
      %p85 = scmp.ne.s32.totalorder %s74, %s75
      %p86 = scmp.eq.s32.totalorder %s17, 0
      %p87 = por %p85, %p86
      %p88 = scmp.ne.s32.totalorder %s74, %s75
      %p89 = scmp.eq.s32.totalorder %s18, 11
      %p90 = por %p88, %p89
      %p92 = scmp.ne.s32.totalorder %s75, %s91
      %p93 = scmp.eq.s32.totalorder %s18, 0
      %p94 = por %p92, %p93
      %s95 = ssub.s32 %s19, %s38
      %s96 = ssub.s32 %s21, %s30
      %s97 = sor.u32 %s95, %s96
      %p98 = scmp.eq.s32.totalorder %s97, 0
      %s100 = sadd.s32 %s99, 1
      %s101 = scalar_select %p98, %s99, %s100
      %p104 = pneg %p98
      %p105 = scmp.eq.s32.totalorder %s12, 11
      %p106 = por %p104, %p105
      %p107 = scmp.ne.s32.totalorder %s99, %s102
      %p108 = scmp.eq.s32.totalorder %s12, 0
      %p109 = por %p107, %p108
      %p110 = scmp.ne.s32.totalorder %s99, %s102
      %p111 = scmp.eq.s32.totalorder %s17, 11
      %p112 = por %p110, %p111
      %p113 = scmp.ne.s32.totalorder %s102, %s103
      %p114 = scmp.eq.s32.totalorder %s17, 0
      %p115 = por %p113, %p114
      %p116 = scmp.ne.s32.totalorder %s102, %s103
      %p117 = scmp.eq.s32.totalorder %s18, 11
      %p118 = por %p116, %p117
      %p120 = scmp.ne.s32.totalorder %s103, %s119
      %p121 = scmp.eq.s32.totalorder %s18, 0
      %p122 = por %p120, %p121
      %s123 = ssub.s32 %s19, %s38
      %s124 = ssub.s32 %s20, %s34
      %s125 = sor.u32 %s123, %s124
      %p126 = scmp.eq.s32.totalorder %s125, 0
      %s128 = sadd.s32 %s127, 1
      %s129 = scalar_select %p126, %s127, %s128
      %p132 = pneg %p126
      %p133 = scmp.eq.s32.totalorder %s12, 11
      %p134 = por %p132, %p133
      %p135 = scmp.ne.s32.totalorder %s127, %s130
      %p136 = scmp.eq.s32.totalorder %s12, 0
      %p137 = por %p135, %p136
      %p138 = scmp.ne.s32.totalorder %s127, %s130
      %p139 = scmp.eq.s32.totalorder %s17, 11
      %p140 = por %p138, %p139
      %p141 = scmp.ne.s32.totalorder %s130, %s131
      %p142 = scmp.eq.s32.totalorder %s17, 0
      %p143 = por %p141, %p142
      %p144 = scmp.ne.s32.totalorder %s130, %s131
      %p145 = scmp.eq.s32.totalorder %s18, 11
      %p146 = por %p144, %p145
      %p148 = scmp.ne.s32.totalorder %s131, %s147
      %p149 = scmp.eq.s32.totalorder %s18, 0
      %p150 = por %p148, %p149
      %p151 = scmp.le.s32.totalorder 1, %s12
      %p152 = scmp.lt.s32.totalorder %s12, 13
      %p153 = pnand %p151, %p152
      %p154 = pneg %p153
      // Predicated region
      $region9: #{tpu_custom_call.1} parent=5 // pred_check
        _
      $region10: #{tpu_custom_call.1} parent=5 // pred_check_branch
        %156 = sbr.rel (%p153) target = $region12
      $region11: #{tpu_custom_call.1} parent=5 // pred_region
        %s157 = ssub.s32 %s12, 1
      $region12: #{tpu_custom_call.1} parent=5 // pred_fallthru
        _
      %p158 = scmp.lt.s32.totalorder %s12, 12
      // Predicated region
      $region13: #{tpu_custom_call.1} parent=5 // pred_check
        %p159 = pneg %p158
      $region14: #{tpu_custom_call.1} parent=5 // pred_check_branch
        %161 = sbr.rel (%p159) target = $region16
      $region15: #{tpu_custom_call.1} parent=5 // pred_region
        // Predicated region
        $region17: #{tpu_custom_call.1} parent=15 // pred_check
          %p162 = pneg %p53
        $region18: #{tpu_custom_call.1} parent=15 // pred_check_branch
          %164 = sbr.rel (%p162) target = $region20
        $region19: #{tpu_custom_call.1} parent=15 // pred_region
          %s165 = smul.u32 16, %s20
          %p166 = scmp.lt.s32.totalorder %s19, 1
          %s167 = scalar_select %p166, %s19, 1
          %p168 = scmp.lt.s32.totalorder %s165, 31
          %s169 = scalar_select %p168, %s165, 31
          %s170 = smul.addr %s167, 32
          %s171 = sadd.s32 %s169, %s170
          %s172 = smul.addr %s171, 8
          %s173 = scalar_lea.vmem %s0, %s172
          %s174 = smul.u32 16, %s20
        $region20: #{tpu_custom_call.1} parent=15 // pred_fallthru
          _
        // Predicated region
        $region21: #{tpu_custom_call.1} parent=15 // pred_check
          %p175 = pneg %p81
        $region22: #{tpu_custom_call.1} parent=15 // pred_check_branch
          %177 = sbr.rel (%p175) target = $region24
        $region23: #{tpu_custom_call.1} parent=15 // pred_region
          %s178 = smul.u32 16, %s21
          %p179 = scmp.lt.s32.totalorder %s19, 1
          %s180 = scalar_select %p179, %s19, 1
          %p181 = scmp.lt.s32.totalorder %s178, 47
          %s182 = scalar_select %p181, %s178, 47
          %s183 = smul.addr %s180, 48
          %s184 = sadd.s32 %s182, %s183
          %s185 = smul.addr %s184, 8
          %s186 = scalar_lea.vmem %s1, %s185
          %s187 = smul.u32 16, %s21
        $region24: #{tpu_custom_call.1} parent=15 // pred_fallthru
          _
        // Predicated region
        $region25: #{tpu_custom_call.1} parent=15 // pred_check
          %p188 = pneg %p109
        $region26: #{tpu_custom_call.1} parent=15 // pred_check_branch
          %190 = sbr.rel (%p188) target = $region28
        $region27: #{tpu_custom_call.1} parent=15 // pred_region
          %s191 = smul.u32 16, %s21
          %p192 = scmp.lt.s32.totalorder %s19, 1
          %s193 = scalar_select %p192, %s19, 1
          %p194 = scmp.lt.s32.totalorder %s191, 47
          %s195 = scalar_select %p194, %s191, 47
          %s196 = smul.addr %s193, 48
          %s197 = sadd.s32 %s195, %s196
          %s198 = smul.addr %s197, 8
          %s199 = scalar_lea.vmem %s2, %s198
          %s200 = smul.u32 16, %s21
        $region28: #{tpu_custom_call.1} parent=15 // pred_fallthru
          _
      $region16: #{tpu_custom_call.1} parent=5 // pred_fallthru
        _
      %p201 = scmp.le.s32.totalorder 1, %s12
      %p202 = scmp.lt.s32.totalorder %s12, 13
      %p203 = pnand %p201, %p202
      %p204 = pneg %p203
      // Predicated region
      $region29: #{tpu_custom_call.1} parent=5 // pred_check
        _
      $region30: #{tpu_custom_call.1} parent=5 // pred_check_branch
        %206 = sbr.rel (%p203) target = $region32
      $region31: #{tpu_custom_call.1} parent=5 // pred_region
        %s207 = ssub.s32 %s12, 1
        %s208 = smul.u32 16, %s23
        %p209 = scmp.lt.s32.totalorder %s22, 1
        %s210 = scalar_select %p209, %s22, 1
        %p211 = scmp.lt.s32.totalorder %s208, 31
        %s212 = scalar_select %p211, %s208, 31
        %s213 = smul.addr %s210, 32
        %s214 = sadd.s32 %s212, %s213
        %s215 = smul.addr %s214, 8
        %s216 = scalar_lea.vmem %s0, %s215
        %p217 = pneg %p59
        %p218 = pneg %p56
        %s219 = smul.u32 16, %s24
        %p220 = scmp.lt.s32.totalorder %s22, 1
        %s221 = scalar_select %p220, %s22, 1
        %p222 = scmp.lt.s32.totalorder %s219, 47
        %s223 = scalar_select %p222, %s219, 47
        %s224 = smul.addr %s221, 48
        %s225 = sadd.s32 %s223, %s224
        %s226 = smul.addr %s225, 8
        %s227 = scalar_lea.vmem %s1, %s226
        %p228 = pneg %p87
        %p229 = pneg %p84
        %s230 = smul.u32 16, %s24
        %p231 = scmp.lt.s32.totalorder %s22, 1
        %s232 = scalar_select %p231, %s22, 1
        %p233 = scmp.lt.s32.totalorder %s230, 47
        %s234 = scalar_select %p233, %s230, 47
        %s235 = smul.addr %s232, 48
        %s236 = sadd.s32 %s234, %s235
        %s237 = smul.addr %s236, 8
        %s238 = scalar_lea.vmem %s2, %s237
        %p239 = pneg %p115
        %p240 = pneg %p112
        %p241 = pneg %p143
        %p242 = pneg %p140
        %s243 = sand.u32 %s130, 1
        %s244 = scalar_lea.sflag [#allocation7], %s243
        %s245 = sand.u32 %s130, 1
        %s246 = smul.addr %s245, 128
        %s247 = scalar_lea.vmem [#allocation6], %s246
        %s248 = smul.u32 16, %s23
        %p249 = scmp.lt.s32.totalorder %s22, 1
        %s250 = scalar_select %p249, %s22, 1
        %p251 = scmp.lt.s32.totalorder %s248, 31
        %s252 = scalar_select %p251, %s248, 31
        %s253 = smul.addr %s250, 32
        %s254 = sadd.s32 %s252, %s253
        %s255 = smul.addr %s254, 8
        %s256 = scalar_lea.vmem %s0, %s255
        %s257 = smul.u32 16, %s23
        %s258 = smul.u32 16, %s24
        %p259 = scmp.lt.s32.totalorder %s22, 1
        %s260 = scalar_select %p259, %s22, 1
        %p261 = scmp.lt.s32.totalorder %s258, 47
        %s262 = scalar_select %p261, %s258, 47
        %s263 = smul.addr %s260, 48
        %s264 = sadd.s32 %s262, %s263
        %s265 = smul.addr %s264, 8
        %s266 = scalar_lea.vmem %s1, %s265
        %s267 = smul.u32 16, %s24
        %s268 = smul.u32 16, %s24
        %p269 = scmp.lt.s32.totalorder %s22, 1
        %s270 = scalar_select %p269, %s22, 1
        %p271 = scmp.lt.s32.totalorder %s268, 47
        %s272 = scalar_select %p271, %s268, 47
        %s273 = smul.addr %s270, 48
        %s274 = sadd.s32 %s272, %s273
        %s275 = smul.addr %s274, 8
        %s276 = scalar_lea.vmem %s2, %s275
        %s277 = smul.u32 16, %s24
        %s278 = smul.u32 16, %s23
        %p279 = scmp.eq.s32.totalorder %s24, 0
        // Predicated region
        $region33: #{tpu_custom_call.1} parent=31 // pred_check
          %p280 = pneg %p279
        $region34: #{tpu_custom_call.1} parent=31 // pred_check_branch
          %282 = sbr.rel (%p280) target = $region36
        $region35: #{tpu_custom_call.1} parent=31 // pred_region
          %v283 = vld [vmem:[%s256] sm:$0xff]
          %v284 = vld [vmem:[%s256 + $0x8] sm:$0xff]
          %v285 = vld [vmem:[%s256 + $0x10] sm:$0xff]
          %v286 = vld [vmem:[%s256 + $0x18] sm:$0xff]
          %v287 = vld [vmem:[%s256 + $0x20] sm:$0xff]
          %v288 = vld [vmem:[%s256 + $0x28] sm:$0xff]
          %v289 = vld [vmem:[%s256 + $0x30] sm:$0xff]
          %v290 = vld [vmem:[%s256 + $0x38] sm:$0xff]
          %v291 = vld [vmem:[%s256 + $0x40] sm:$0xff]
          %v292 = vld [vmem:[%s256 + $0x48] sm:$0xff]
          %v293 = vld [vmem:[%s256 + $0x50] sm:$0xff]
          %v294 = vld [vmem:[%s256 + $0x58] sm:$0xff]
          %v295 = vld [vmem:[%s256 + $0x60] sm:$0xff]
          %v296 = vld [vmem:[%s256 + $0x68] sm:$0xff]
          %v297 = vld [vmem:[%s256 + $0x70] sm:$0xff]
          %v298 = vld [vmem:[%s256 + $0x78] sm:$0xff]
          %v299 = vmul.f32 %v283, 0.125
          %v300 = vmul.f32 %v284, 0.125
          %v301 = vmul.f32 %v285, 0.125
          %v302 = vmul.f32 %v286, 0.125
          %v303 = vmul.f32 %v287, 0.125
          %v304 = vmul.f32 %v288, 0.125
          %v305 = vmul.f32 %v289, 0.125
          %v306 = vmul.f32 %v290, 0.125
          %v307 = vmul.f32 %v291, 0.125
          %v308 = vmul.f32 %v292, 0.125
          %v309 = vmul.f32 %v293, 0.125
          %v310 = vmul.f32 %v294, 0.125
          %v311 = vmul.f32 %v295, 0.125
          %v312 = vmul.f32 %v296, 0.125
          %v313 = vmul.f32 %v297, 0.125
          %v314 = vmul.f32 %v298, 0.125
          %vm315 = vcmask 523264
          %316 = vst.msk [vmem:[#allocation2] sm:$0xff] %vm315, %v299
          %317 = vst.msk [vmem:[#allocation2 + $0x8] sm:$0xff] %vm315, %v300
          %318 = vst.msk [vmem:[#allocation2 + $0x10] sm:$0xff] %vm315, %v301
          %319 = vst.msk [vmem:[#allocation2 + $0x18] sm:$0xff] %vm315, %v302
          %320 = vst.msk [vmem:[#allocation2 + $0x20] sm:$0xff] %vm315, %v303
          %321 = vst.msk [vmem:[#allocation2 + $0x28] sm:$0xff] %vm315, %v304
          %322 = vst.msk [vmem:[#allocation2 + $0x30] sm:$0xff] %vm315, %v305
          %323 = vst.msk [vmem:[#allocation2 + $0x38] sm:$0xff] %vm315, %v306
          %324 = vst.msk [vmem:[#allocation2 + $0x40] sm:$0xff] %vm315, %v307
          %325 = vst.msk [vmem:[#allocation2 + $0x48] sm:$0xff] %vm315, %v308
          %326 = vst.msk [vmem:[#allocation2 + $0x50] sm:$0xff] %vm315, %v309
          %327 = vst.msk [vmem:[#allocation2 + $0x58] sm:$0xff] %vm315, %v310
          %328 = vst.msk [vmem:[#allocation2 + $0x60] sm:$0xff] %vm315, %v311
          %329 = vst.msk [vmem:[#allocation2 + $0x68] sm:$0xff] %vm315, %v312
          %330 = vst.msk [vmem:[#allocation2 + $0x70] sm:$0xff] %vm315, %v313
          %331 = vst.msk [vmem:[#allocation2 + $0x78] sm:$0xff] %vm315, %v314
          %vm332 = vcmask 7168
          %333 = vst.msk [vmem:[#allocation3] sm:$0xff] %vm332, -inf
          %334 = vst.msk [vmem:[#allocation3 + $0x8] sm:$0xff] %vm332, -inf
          %335 = vst.msk [vmem:[#allocation3 + $0x10] sm:$0xff] %vm332, -inf
          %336 = vst.msk [vmem:[#allocation3 + $0x18] sm:$0xff] %vm332, -inf
          %337 = vst.msk [vmem:[#allocation3 + $0x20] sm:$0xff] %vm332, -inf
          %338 = vst.msk [vmem:[#allocation3 + $0x28] sm:$0xff] %vm332, -inf
          %339 = vst.msk [vmem:[#allocation3 + $0x30] sm:$0xff] %vm332, -inf
          %340 = vst.msk [vmem:[#allocation3 + $0x38] sm:$0xff] %vm332, -inf
          %341 = vst.msk [vmem:[#allocation3 + $0x40] sm:$0xff] %vm332, -inf
          %342 = vst.msk [vmem:[#allocation3 + $0x48] sm:$0xff] %vm332, -inf
          %343 = vst.msk [vmem:[#allocation3 + $0x50] sm:$0xff] %vm332, -inf
          %344 = vst.msk [vmem:[#allocation3 + $0x58] sm:$0xff] %vm332, -inf
          %345 = vst.msk [vmem:[#allocation3 + $0x60] sm:$0xff] %vm332, -inf
          %346 = vst.msk [vmem:[#allocation3 + $0x68] sm:$0xff] %vm332, -inf
          %347 = vst.msk [vmem:[#allocation3 + $0x70] sm:$0xff] %vm332, -inf
          %348 = vst.msk [vmem:[#allocation3 + $0x78] sm:$0xff] %vm332, -inf
          %349 = vst.msk [vmem:[#allocation4] sm:$0xff] %vm332, 0.0
          %350 = vst.msk [vmem:[#allocation4 + $0x8] sm:$0xff] %vm332, 0.0
          %351 = vst.msk [vmem:[#allocation4 + $0x10] sm:$0xff] %vm332, 0.0
          %352 = vst.msk [vmem:[#allocation4 + $0x18] sm:$0xff] %vm332, 0.0
          %353 = vst.msk [vmem:[#allocation4 + $0x20] sm:$0xff] %vm332, 0.0
          %354 = vst.msk [vmem:[#allocation4 + $0x28] sm:$0xff] %vm332, 0.0
          %355 = vst.msk [vmem:[#allocation4 + $0x30] sm:$0xff] %vm332, 0.0
          %356 = vst.msk [vmem:[#allocation4 + $0x38] sm:$0xff] %vm332, 0.0
          %357 = vst.msk [vmem:[#allocation4 + $0x40] sm:$0xff] %vm332, 0.0
          %358 = vst.msk [vmem:[#allocation4 + $0x48] sm:$0xff] %vm332, 0.0
          %359 = vst.msk [vmem:[#allocation4 + $0x50] sm:$0xff] %vm332, 0.0
          %360 = vst.msk [vmem:[#allocation4 + $0x58] sm:$0xff] %vm332, 0.0
          %361 = vst.msk [vmem:[#allocation4 + $0x60] sm:$0xff] %vm332, 0.0
          %362 = vst.msk [vmem:[#allocation4 + $0x68] sm:$0xff] %vm332, 0.0
          %363 = vst.msk [vmem:[#allocation4 + $0x70] sm:$0xff] %vm332, 0.0
          %364 = vst.msk [vmem:[#allocation4 + $0x78] sm:$0xff] %vm332, 0.0
          %365 = vst [vmem:[#allocation5] sm:$0xff] 0.0
          %366 = vst [vmem:[#allocation5 + $0x8] sm:$0xff] 0.0
          %367 = vst [vmem:[#allocation5 + $0x10] sm:$0xff] 0.0
          %368 = vst [vmem:[#allocation5 + $0x18] sm:$0xff] 0.0
          %369 = vst [vmem:[#allocation5 + $0x20] sm:$0xff] 0.0
          %370 = vst [vmem:[#allocation5 + $0x28] sm:$0xff] 0.0
          %371 = vst [vmem:[#allocation5 + $0x30] sm:$0xff] 0.0
          %372 = vst [vmem:[#allocation5 + $0x38] sm:$0xff] 0.0
          %373 = vst [vmem:[#allocation5 + $0x40] sm:$0xff] 0.0
          %374 = vst [vmem:[#allocation5 + $0x48] sm:$0xff] 0.0
          %375 = vst [vmem:[#allocation5 + $0x50] sm:$0xff] 0.0
          %376 = vst [vmem:[#allocation5 + $0x58] sm:$0xff] 0.0
          %377 = vst [vmem:[#allocation5 + $0x60] sm:$0xff] 0.0
          %378 = vst [vmem:[#allocation5 + $0x68] sm:$0xff] 0.0
          %379 = vst [vmem:[#allocation5 + $0x70] sm:$0xff] 0.0
          %380 = vst [vmem:[#allocation5 + $0x78] sm:$0xff] 0.0
        $region36: #{tpu_custom_call.1} parent=31 // pred_fallthru
          _
        %v381 = vld [vmem:[#allocation2] sm:$0xff]
        %v382 = vld [vmem:[#allocation2 + $0x8] sm:$0xff]
        %v383 = vld [vmem:[#allocation2 + $0x10] sm:$0xff]
        %v384 = vld [vmem:[#allocation2 + $0x18] sm:$0xff]
        %v385 = vld [vmem:[#allocation2 + $0x20] sm:$0xff]
        %v386 = vld [vmem:[#allocation2 + $0x28] sm:$0xff]
        %v387 = vld [vmem:[#allocation2 + $0x30] sm:$0xff]
        %v388 = vld [vmem:[#allocation2 + $0x38] sm:$0xff]
        %v389 = vld [vmem:[#allocation2 + $0x40] sm:$0xff]
        %v390 = vld [vmem:[#allocation2 + $0x48] sm:$0xff]
        %v391 = vld [vmem:[#allocation2 + $0x50] sm:$0xff]
        %v392 = vld [vmem:[#allocation2 + $0x58] sm:$0xff]
        %v393 = vld [vmem:[#allocation2 + $0x60] sm:$0xff]
        %v394 = vld [vmem:[#allocation2 + $0x68] sm:$0xff]
        %v395 = vld [vmem:[#allocation2 + $0x70] sm:$0xff]
        %v396 = vld [vmem:[#allocation2 + $0x78] sm:$0xff]
        %v397 = vld [vmem:[%s266] sm:$0xff]
        %v398 = vld [vmem:[%s266 + $0x8] sm:$0xff]
        %v399 = vld [vmem:[%s266 + $0x10] sm:$0xff]
        %v400 = vld [vmem:[%s266 + $0x18] sm:$0xff]
        %v401 = vld [vmem:[%s266 + $0x20] sm:$0xff]
        %v402 = vld [vmem:[%s266 + $0x28] sm:$0xff]
        %v403 = vld [vmem:[%s266 + $0x30] sm:$0xff]
        %v404 = vld [vmem:[%s266 + $0x38] sm:$0xff]
        %v405 = vld [vmem:[%s266 + $0x40] sm:$0xff]
        %v406 = vld [vmem:[%s266 + $0x48] sm:$0xff]
        %v407 = vld [vmem:[%s266 + $0x50] sm:$0xff]
        %v408 = vld [vmem:[%s266 + $0x58] sm:$0xff]
        %v409 = vld [vmem:[%s266 + $0x60] sm:$0xff]
        %v410 = vld [vmem:[%s266 + $0x68] sm:$0xff]
        %v411 = vld [vmem:[%s266 + $0x70] sm:$0xff]
        %v412 = vld [vmem:[%s266 + $0x78] sm:$0xff]
        %v413 = vld [vmem:[%s276] sm:$0xff]
        %v414 = vld [vmem:[%s276 + $0x8] sm:$0xff]
        %v415 = vld [vmem:[%s276 + $0x10] sm:$0xff]
        %v416 = vld [vmem:[%s276 + $0x18] sm:$0xff]
        %v417 = vld [vmem:[%s276 + $0x20] sm:$0xff]
        %v418 = vld [vmem:[%s276 + $0x28] sm:$0xff]
        %v419 = vld [vmem:[%s276 + $0x30] sm:$0xff]
        %v420 = vld [vmem:[%s276 + $0x38] sm:$0xff]
        %v421 = vld [vmem:[%s276 + $0x40] sm:$0xff]
        %v422 = vld [vmem:[%s276 + $0x48] sm:$0xff]
        %v423 = vld [vmem:[%s276 + $0x50] sm:$0xff]
        %v424 = vld [vmem:[%s276 + $0x58] sm:$0xff]
        %v425 = vld [vmem:[%s276 + $0x60] sm:$0xff]
        %v426 = vld [vmem:[%s276 + $0x68] sm:$0xff]
        %v427 = vld [vmem:[%s276 + $0x70] sm:$0xff]
        %v428 = vld [vmem:[%s276 + $0x78] sm:$0xff]
        %vm429 = vcmask 523264
        %v431 = vsel %vm429, %v381, 0
        %v434 = vsel %vm429, %v382, 0
        %v437 = vsel %vm429, %v383, 0
        %v440 = vsel %vm429, %v384, 0
        %v443 = vsel %vm429, %v385, 0
        %v446 = vsel %vm429, %v386, 0
        %v449 = vsel %vm429, %v387, 0
        %v452 = vsel %vm429, %v388, 0
        %v455 = vsel %vm429, %v389, 0
        %v458 = vsel %vm429, %v390, 0
        %v461 = vsel %vm429, %v391, 0
        %v464 = vsel %vm429, %v392, 0
        %v467 = vsel %vm429, %v393, 0
        %v470 = vsel %vm429, %v394, 0
        %v473 = vsel %vm429, %v395, 0
        %v476 = vsel %vm429, %v396, 0
        %v479 = vsel %vm429, %v397, 0
        %v482 = vsel %vm429, %v398, 0
        %v485 = vsel %vm429, %v399, 0
        %v488 = vsel %vm429, %v400, 0
        %v491 = vsel %vm429, %v401, 0
        %v494 = vsel %vm429, %v402, 0
        %v497 = vsel %vm429, %v403, 0
        %v500 = vsel %vm429, %v404, 0
        %v503 = vsel %vm429, %v405, 0
        %v506 = vsel %vm429, %v406, 0
        %v509 = vsel %vm429, %v407, 0
        %v512 = vsel %vm429, %v408, 0
        %v515 = vsel %vm429, %v409, 0
        %v518 = vsel %vm429, %v410, 0
        %v521 = vsel %vm429, %v411, 0
        %v524 = vsel %vm429, %v412, 0
        %526 = vmatprep.subr.mxu0 0.0
        %527 = vmatpush1.xpose.msra.mxu0 %v479
        %528 = vmatprep.subr.mxu0 0.0
        %529 = vmatpush1.xpose.msra.mxu0 %v482
        %530 = vmatprep.subr.mxu0 0.0
        %531 = vmatpush1.xpose.msra.mxu0 %v485
        %532 = vmatprep.subr.mxu0 0.0
        %533 = vmatpush1.xpose.msra.mxu0 %v488
        %534 = vmatprep.subr.mxu0 0.0
        %535 = vmatpush1.xpose.msra.mxu0 %v491
        %536 = vmatprep.subr.mxu0 0.0
        %537 = vmatpush1.xpose.msra.mxu0 %v494
        %538 = vmatprep.subr.mxu0 0.0
        %539 = vmatpush1.xpose.msra.mxu0 %v497
        %540 = vmatprep.subr.mxu0 0.0
        %541 = vmatpush1.xpose.msra.mxu0 %v500
        %542 = vmatprep.subr.mxu0 0.0
        %543 = vmatpush1.xpose.msra.mxu0 %v503
        %544 = vmatprep.subr.mxu0 0.0
        %545 = vmatpush1.xpose.msra.mxu0 %v506
        %546 = vmatprep.subr.mxu0 0.0
        %547 = vmatpush1.xpose.msra.mxu0 %v509
        %548 = vmatprep.subr.mxu0 0.0
        %549 = vmatpush1.xpose.msra.mxu0 %v512
        %550 = vmatprep.subr.mxu0 0.0
        %551 = vmatpush1.xpose.msra.mxu0 %v515
        %552 = vmatprep.subr.mxu0 0.0
        %553 = vmatpush1.xpose.msra.mxu0 %v518
        %554 = vmatprep.subr.mxu0 0.0
        %555 = vmatpush1.xpose.msra.mxu0 %v521
        %556 = vmatprep.subr.mxu0 0.0
        %557 = vmatpush1.xpose.msra.mxu0 %v524
        %558 = vmatprep.subr.mxu0 0.0
        %559 = vmatpush1.xpose.msra.mxu0 0.0
        %560 = vmatprep.subr.mxu0 0.0
        %561 = vmatpush1.xpose.msra.mxu0 0.0
        %562 = vmatprep.subr.mxu0 0.0
        %563 = vmatpush1.xpose.msra.mxu0 0.0
        %564 = vmatprep.subr.mxu0 0.0
        %565 = vmatpush1.xpose.msra.mxu0 0.0
        %566 = vmatprep.subr.mxu0 0.0
        %567 = vmatpush1.xpose.msra.mxu0 0.0
        %568 = vmatprep.subr.mxu0 0.0
        %569 = vmatpush1.xpose.msra.mxu0 0.0
        %570 = vmatprep.subr.mxu0 0.0
        %571 = vmatpush1.xpose.msra.mxu0 0.0
        %572 = vmatprep.subr.mxu0 0.0
        %573 = vmatpush1.xpose.msra.mxu0 0.0
        %574 = vmatprep.subr.mxu0 0.0
        %575 = vmatpush1.xpose.msra.mxu0 0.0
        %576 = vmatprep.subr.mxu0 0.0
        %577 = vmatpush1.xpose.msra.mxu0 0.0
        %578 = vmatprep.subr.mxu0 0.0
        %579 = vmatpush1.xpose.msra.mxu0 0.0
        %580 = vmatprep.subr.mxu0 0.0
        %581 = vmatpush1.xpose.msra.mxu0 0.0
        %582 = vmatprep.subr.mxu0 0.0
        %583 = vmatpush1.xpose.msra.mxu0 0.0
        %584 = vmatprep.subr.mxu0 0.0
        %585 = vmatpush1.xpose.msra.mxu0 0.0
        %586 = vmatprep.subr.mxu0 0.0
        %587 = vmatpush1.xpose.msra.mxu0 0.0
        %588 = vmatprep.subr.mxu0 0.0
        %589 = vmatpush1.xpose.msra.mxu0 0.0
        %590 = vmatprep.mubr.f32.mxu0 0.0
        %591 = vmatmul.mubr.f32.gmra.mrb[0].mxu0 %v431
        %v592 = vpop.f32.mrb[0].mxu0
        %v593 = vadd.f32 0.0, %v592
        %v594 = vpop.f32.mrb[0].mxu0
        %595 = vmatprep.mubr.f32.mxu0 0.0
        %596 = vmatmul.mubr.f32.gmra.mrb[0].mxu0 %v434
        %v597 = vpop.f32.mrb[0].mxu0
        %v598 = vadd.f32 0.0, %v597
        %v599 = vpop.f32.mrb[0].mxu0
        %600 = vmatprep.mubr.f32.mxu0 0.0
        %601 = vmatmul.mubr.f32.gmra.mrb[0].mxu0 %v437
        %v602 = vpop.f32.mrb[0].mxu0
        %v603 = vadd.f32 0.0, %v602
        %v604 = vpop.f32.mrb[0].mxu0
        %605 = vmatprep.mubr.f32.mxu0 0.0
        %606 = vmatmul.mubr.f32.gmra.mrb[0].mxu0 %v440
        %v607 = vpop.f32.mrb[0].mxu0
        %v608 = vadd.f32 0.0, %v607
        %v609 = vpop.f32.mrb[0].mxu0
        %610 = vmatprep.mubr.f32.mxu0 0.0
        %611 = vmatmul.mubr.f32.gmra.mrb[0].mxu0 %v443
        %v612 = vpop.f32.mrb[0].mxu0
        %v613 = vadd.f32 0.0, %v612
        %v614 = vpop.f32.mrb[0].mxu0
        %615 = vmatprep.mubr.f32.mxu0 0.0
        %616 = vmatmul.mubr.f32.gmra.mrb[0].mxu0 %v446
        %v617 = vpop.f32.mrb[0].mxu0
        %v618 = vadd.f32 0.0, %v617
        %v619 = vpop.f32.mrb[0].mxu0
        %620 = vmatprep.mubr.f32.mxu0 0.0
        %621 = vmatmul.mubr.f32.gmra.mrb[0].mxu0 %v449
        %v622 = vpop.f32.mrb[0].mxu0
        %v623 = vadd.f32 0.0, %v622
        %v624 = vpop.f32.mrb[0].mxu0
        %625 = vmatprep.mubr.f32.mxu0 0.0
        %626 = vmatmul.mubr.f32.gmra.mrb[0].mxu0 %v452
        %v627 = vpop.f32.mrb[0].mxu0
        %v628 = vadd.f32 0.0, %v627
        %v629 = vpop.f32.mrb[0].mxu0
        %630 = vmatprep.mubr.f32.mxu0 0.0
        %631 = vmatmul.mubr.f32.gmra.mrb[0].mxu0 %v455
        %v632 = vpop.f32.mrb[0].mxu0
        %v633 = vadd.f32 0.0, %v632
        %v634 = vpop.f32.mrb[0].mxu0
        %635 = vmatprep.mubr.f32.mxu0 0.0
        %636 = vmatmul.mubr.f32.gmra.mrb[0].mxu0 %v458
        %v637 = vpop.f32.mrb[0].mxu0
        %v638 = vadd.f32 0.0, %v637
        %v639 = vpop.f32.mrb[0].mxu0
        %640 = vmatprep.mubr.f32.mxu0 0.0
        %641 = vmatmul.mubr.f32.gmra.mrb[0].mxu0 %v461
        %v642 = vpop.f32.mrb[0].mxu0
        %v643 = vadd.f32 0.0, %v642
        %v644 = vpop.f32.mrb[0].mxu0
        %645 = vmatprep.mubr.f32.mxu0 0.0
        %646 = vmatmul.mubr.f32.gmra.mrb[0].mxu0 %v464
        %v647 = vpop.f32.mrb[0].mxu0
        %v648 = vadd.f32 0.0, %v647
        %v649 = vpop.f32.mrb[0].mxu0
        %650 = vmatprep.mubr.f32.mxu0 0.0
        %651 = vmatmul.mubr.f32.gmra.mrb[0].mxu0 %v467
        %v652 = vpop.f32.mrb[0].mxu0
        %v653 = vadd.f32 0.0, %v652
        %v654 = vpop.f32.mrb[0].mxu0
        %655 = vmatprep.mubr.f32.mxu0 0.0
        %656 = vmatmul.mubr.f32.gmra.mrb[0].mxu0 %v470
        %v657 = vpop.f32.mrb[0].mxu0
        %v658 = vadd.f32 0.0, %v657
        %v659 = vpop.f32.mrb[0].mxu0
        %660 = vmatprep.mubr.f32.mxu0 0.0
        %661 = vmatmul.mubr.f32.gmra.mrb[0].mxu0 %v473
        %v662 = vpop.f32.mrb[0].mxu0
        %v663 = vadd.f32 0.0, %v662
        %v664 = vpop.f32.mrb[0].mxu0
        %665 = vmatprep.mubr.f32.mxu0 0.0
        %666 = vmatmul.mubr.f32.gmra.mrb[0].mxu0 %v476
        %v667 = vpop.f32.mrb[0].mxu0
        %v668 = vadd.f32 0.0, %v667
        %v669 = vpop.f32.mrb[0].mxu0
        %670 = vdwg.mxu0
        %s671 = smul.u32 %s24, 128
        %v672 = vlaneseq
        %v673 = vand.u32 %v672, 127
        %v674 = vstv %s671
        %v675 = vadd.s32 %v674, %v673
        %vm676 = vcmp.lt.s32.totalorder %v675, 320
        %v677 = vsel %vm676, %v593, -inf
        %v678 = vsel %vm676, %v598, -inf
        %v679 = vsel %vm676, %v603, -inf
        %v680 = vsel %vm676, %v608, -inf
        %v681 = vsel %vm676, %v613, -inf
        %v682 = vsel %vm676, %v618, -inf
        %v683 = vsel %vm676, %v623, -inf
        %v684 = vsel %vm676, %v628, -inf
        %v685 = vsel %vm676, %v633, -inf
        %v686 = vsel %vm676, %v638, -inf
        %v687 = vsel %vm676, %v643, -inf
        %v688 = vsel %vm676, %v648, -inf
        %v689 = vsel %vm676, %v653, -inf
        %v690 = vsel %vm676, %v658, -inf
        %v691 = vsel %vm676, %v663, -inf
        %v692 = vsel %vm676, %v668, -inf
        %v693 = vld [vmem:[#allocation3] sm:$0xff]
        %v694 = vld [vmem:[#allocation3 + $0x8] sm:$0xff]
        %v695 = vld [vmem:[#allocation3 + $0x10] sm:$0xff]
        %v696 = vld [vmem:[#allocation3 + $0x18] sm:$0xff]
        %v697 = vld [vmem:[#allocation3 + $0x20] sm:$0xff]
        %v698 = vld [vmem:[#allocation3 + $0x28] sm:$0xff]
        %v699 = vld [vmem:[#allocation3 + $0x30] sm:$0xff]
        %v700 = vld [vmem:[#allocation3 + $0x38] sm:$0xff]
        %v701 = vld [vmem:[#allocation3 + $0x40] sm:$0xff]
        %v702 = vld [vmem:[#allocation3 + $0x48] sm:$0xff]
        %v703 = vld [vmem:[#allocation3 + $0x50] sm:$0xff]
        %v704 = vld [vmem:[#allocation3 + $0x58] sm:$0xff]
        %v705 = vld [vmem:[#allocation3 + $0x60] sm:$0xff]
        %v706 = vld [vmem:[#allocation3 + $0x68] sm:$0xff]
        %v707 = vld [vmem:[#allocation3 + $0x70] sm:$0xff]
        %v708 = vld [vmem:[#allocation3 + $0x78] sm:$0xff]
        %709 = vmax.xlane.f32.xlu0 %v677
        %v710 = vpop.xlane.xlu0 %709
        %711 = vmax.xlane.f32.xlu0 %v678
        %v712 = vpop.xlane.xlu0 %711
        %713 = vmax.xlane.f32.xlu0 %v679
        %v714 = vpop.xlane.xlu0 %713
        %715 = vmax.xlane.f32.xlu0 %v680
        %v716 = vpop.xlane.xlu0 %715
        %717 = vmax.xlane.f32.xlu0 %v681
        %v718 = vpop.xlane.xlu0 %717
        %719 = vmax.xlane.f32.xlu0 %v682
        %v720 = vpop.xlane.xlu0 %719
        %721 = vmax.xlane.f32.xlu0 %v683
        %v722 = vpop.xlane.xlu0 %721
        %723 = vmax.xlane.f32.xlu0 %v684
        %v724 = vpop.xlane.xlu0 %723
        %725 = vmax.xlane.f32.xlu0 %v685
        %v726 = vpop.xlane.xlu0 %725
        %727 = vmax.xlane.f32.xlu0 %v686
        %v728 = vpop.xlane.xlu0 %727
        %729 = vmax.xlane.f32.xlu0 %v687
        %v730 = vpop.xlane.xlu0 %729
        %731 = vmax.xlane.f32.xlu0 %v688
        %v732 = vpop.xlane.xlu0 %731
        %733 = vmax.xlane.f32.xlu0 %v689
        %v734 = vpop.xlane.xlu0 %733
        %735 = vmax.xlane.f32.xlu0 %v690
        %v736 = vpop.xlane.xlu0 %735
        %737 = vmax.xlane.f32.xlu0 %v691
        %v738 = vpop.xlane.xlu0 %737
        %739 = vmax.xlane.f32.xlu0 %v692
        %v740 = vpop.xlane.xlu0 %739
        %v741 = vmax.f32 %v693, %v710
        %v742 = vmax.f32 %v694, %v712
        %v743 = vmax.f32 %v695, %v714
        %v744 = vmax.f32 %v696, %v716
        %v745 = vmax.f32 %v697, %v718
        %v746 = vmax.f32 %v698, %v720
        %v747 = vmax.f32 %v699, %v722
        %v748 = vmax.f32 %v700, %v724
        %v749 = vmax.f32 %v701, %v726
        %v750 = vmax.f32 %v702, %v728
        %v751 = vmax.f32 %v703, %v730
        %v752 = vmax.f32 %v704, %v732
        %v753 = vmax.f32 %v705, %v734
        %v754 = vmax.f32 %v706, %v736
        %v755 = vmax.f32 %v707, %v738
        %v756 = vmax.f32 %v708, %v740
        %v757 = vsub.f32 %v693, %v741
        %v758 = vsub.f32 %v694, %v742
        %v759 = vsub.f32 %v695, %v743
        %v760 = vsub.f32 %v696, %v744
        %v761 = vsub.f32 %v697, %v745
        %v762 = vsub.f32 %v698, %v746
        %v763 = vsub.f32 %v699, %v747
        %v764 = vsub.f32 %v700, %v748
        %v765 = vsub.f32 %v701, %v749
        %v766 = vsub.f32 %v702, %v750
        %v767 = vsub.f32 %v703, %v751
        %v768 = vsub.f32 %v704, %v752
        %v769 = vsub.f32 %v705, %v753
        %v770 = vsub.f32 %v706, %v754
        %v771 = vsub.f32 %v707, %v755
        %v772 = vsub.f32 %v708, %v756
        %v773 = vmul.f32 %v757, 1.442695
        %v774 = vpow.pop %v773
        %v775 = vmul.f32 %v758, 1.442695
        %v776 = vpow.pop %v775
        %v777 = vmul.f32 %v759, 1.442695
        %v778 = vpow.pop %v777
        %v779 = vmul.f32 %v760, 1.442695
        %v780 = vpow.pop %v779
        %v781 = vmul.f32 %v761, 1.442695
        %v782 = vpow.pop %v781
        %v783 = vmul.f32 %v762, 1.442695
        %v784 = vpow.pop %v783
        %v785 = vmul.f32 %v763, 1.442695
        %v786 = vpow.pop %v785
        %v787 = vmul.f32 %v764, 1.442695
        %v788 = vpow.pop %v787
        %v789 = vmul.f32 %v765, 1.442695
        %v790 = vpow.pop %v789
        %v791 = vmul.f32 %v766, 1.442695
        %v792 = vpow.pop %v791
        %v793 = vmul.f32 %v767, 1.442695
        %v794 = vpow.pop %v793
        %v795 = vmul.f32 %v768, 1.442695
        %v796 = vpow.pop %v795
        %v797 = vmul.f32 %v769, 1.442695
        %v798 = vpow.pop %v797
        %v799 = vmul.f32 %v770, 1.442695
        %v800 = vpow.pop %v799
        %v801 = vmul.f32 %v771, 1.442695
        %v802 = vpow.pop %v801
        %v803 = vmul.f32 %v772, 1.442695
        %v804 = vpow.pop %v803
        %806 = vset.pattern.permute.xlu0 0
        %807 = vperm.xlu0 %806, %v741
        %v808 = vpop.permute.xlu0 %807
        %811 = vset.pattern.permute.xlu0 0
        %812 = vperm.xlu0 %811, %v742
        %v813 = vpop.permute.xlu0 %812
        %816 = vset.pattern.permute.xlu0 0
        %817 = vperm.xlu0 %816, %v743
        %v818 = vpop.permute.xlu0 %817
        %821 = vset.pattern.permute.xlu0 0
        %822 = vperm.xlu0 %821, %v744
        %v823 = vpop.permute.xlu0 %822
        %826 = vset.pattern.permute.xlu0 0
        %827 = vperm.xlu0 %826, %v745
        %v828 = vpop.permute.xlu0 %827
        %831 = vset.pattern.permute.xlu0 0
        %832 = vperm.xlu0 %831, %v746
        %v833 = vpop.permute.xlu0 %832
        %836 = vset.pattern.permute.xlu0 0
        %837 = vperm.xlu0 %836, %v747
        %v838 = vpop.permute.xlu0 %837
        %841 = vset.pattern.permute.xlu0 0
        %842 = vperm.xlu0 %841, %v748
        %v843 = vpop.permute.xlu0 %842
        %846 = vset.pattern.permute.xlu0 0
        %847 = vperm.xlu0 %846, %v749
        %v848 = vpop.permute.xlu0 %847
        %851 = vset.pattern.permute.xlu0 0
        %852 = vperm.xlu0 %851, %v750
        %v853 = vpop.permute.xlu0 %852
        %856 = vset.pattern.permute.xlu0 0
        %857 = vperm.xlu0 %856, %v751
        %v858 = vpop.permute.xlu0 %857
        %861 = vset.pattern.permute.xlu0 0
        %862 = vperm.xlu0 %861, %v752
        %v863 = vpop.permute.xlu0 %862
        %866 = vset.pattern.permute.xlu0 0
        %867 = vperm.xlu0 %866, %v753
        %v868 = vpop.permute.xlu0 %867
        %871 = vset.pattern.permute.xlu0 0
        %872 = vperm.xlu0 %871, %v754
        %v873 = vpop.permute.xlu0 %872
        %876 = vset.pattern.permute.xlu0 0
        %877 = vperm.xlu0 %876, %v755
        %v878 = vpop.permute.xlu0 %877
        %881 = vset.pattern.permute.xlu0 0
        %882 = vperm.xlu0 %881, %v756
        %v883 = vpop.permute.xlu0 %882
        %v885 = vsub.f32 %v677, %v808
        %v886 = vsub.f32 %v678, %v813
        %v887 = vsub.f32 %v679, %v818
        %v888 = vsub.f32 %v680, %v823
        %v889 = vsub.f32 %v681, %v828
        %v890 = vsub.f32 %v682, %v833
        %v891 = vsub.f32 %v683, %v838
        %v892 = vsub.f32 %v684, %v843
        %v893 = vsub.f32 %v685, %v848
        %v894 = vsub.f32 %v686, %v853
        %v895 = vsub.f32 %v687, %v858
        %v896 = vsub.f32 %v688, %v863
        %v897 = vsub.f32 %v689, %v868
        %v898 = vsub.f32 %v690, %v873
        %v899 = vsub.f32 %v691, %v878
        %v900 = vsub.f32 %v692, %v883
        %v901 = vmul.f32 %v885, 1.442695
        %v902 = vpow.pop %v901
        %v903 = vmul.f32 %v886, 1.442695
        %v904 = vpow.pop %v903
        %v905 = vmul.f32 %v887, 1.442695
        %v906 = vpow.pop %v905
        %v907 = vmul.f32 %v888, 1.442695
        %v908 = vpow.pop %v907
        %v909 = vmul.f32 %v889, 1.442695
        %v910 = vpow.pop %v909
        %v911 = vmul.f32 %v890, 1.442695
        %v912 = vpow.pop %v911
        %v913 = vmul.f32 %v891, 1.442695
        %v914 = vpow.pop %v913
        %v915 = vmul.f32 %v892, 1.442695
        %v916 = vpow.pop %v915
        %v917 = vmul.f32 %v893, 1.442695
        %v918 = vpow.pop %v917
        %v919 = vmul.f32 %v894, 1.442695
        %v920 = vpow.pop %v919
        %v921 = vmul.f32 %v895, 1.442695
        %v922 = vpow.pop %v921
        %v923 = vmul.f32 %v896, 1.442695
        %v924 = vpow.pop %v923
        %v925 = vmul.f32 %v897, 1.442695
        %v926 = vpow.pop %v925
        %v927 = vmul.f32 %v898, 1.442695
        %v928 = vpow.pop %v927
        %v929 = vmul.f32 %v899, 1.442695
        %v930 = vpow.pop %v929
        %v931 = vmul.f32 %v900, 1.442695
        %v932 = vpow.pop %v931
        %v933 = vld [vmem:[#allocation4] sm:$0xff]
        %v934 = vld [vmem:[#allocation4 + $0x8] sm:$0xff]
        %v935 = vld [vmem:[#allocation4 + $0x10] sm:$0xff]
        %v936 = vld [vmem:[#allocation4 + $0x18] sm:$0xff]
        %v937 = vld [vmem:[#allocation4 + $0x20] sm:$0xff]
        %v938 = vld [vmem:[#allocation4 + $0x28] sm:$0xff]
        %v939 = vld [vmem:[#allocation4 + $0x30] sm:$0xff]
        %v940 = vld [vmem:[#allocation4 + $0x38] sm:$0xff]
        %v941 = vld [vmem:[#allocation4 + $0x40] sm:$0xff]
        %v942 = vld [vmem:[#allocation4 + $0x48] sm:$0xff]
        %v943 = vld [vmem:[#allocation4 + $0x50] sm:$0xff]
        %v944 = vld [vmem:[#allocation4 + $0x58] sm:$0xff]
        %v945 = vld [vmem:[#allocation4 + $0x60] sm:$0xff]
        %v946 = vld [vmem:[#allocation4 + $0x68] sm:$0xff]
        %v947 = vld [vmem:[#allocation4 + $0x70] sm:$0xff]
        %v948 = vld [vmem:[#allocation4 + $0x78] sm:$0xff]
        %v949 = vmul.f32 %v774, %v933
        %v950 = vmul.f32 %v776, %v934
        %v951 = vmul.f32 %v778, %v935
        %v952 = vmul.f32 %v780, %v936
        %v953 = vmul.f32 %v782, %v937
        %v954 = vmul.f32 %v784, %v938
        %v955 = vmul.f32 %v786, %v939
        %v956 = vmul.f32 %v788, %v940
        %v957 = vmul.f32 %v790, %v941
        %v958 = vmul.f32 %v792, %v942
        %v959 = vmul.f32 %v794, %v943
        %v960 = vmul.f32 %v796, %v944
        %v961 = vmul.f32 %v798, %v945
        %v962 = vmul.f32 %v800, %v946
        %v963 = vmul.f32 %v802, %v947
        %v964 = vmul.f32 %v804, %v948
        %965 = vadd.xlane.f32.xlu0 %v902
        %v966 = vpop.xlane.xlu0 %965
        %967 = vadd.xlane.f32.xlu0 %v904
        %v968 = vpop.xlane.xlu0 %967
        %969 = vadd.xlane.f32.xlu0 %v906
        %v970 = vpop.xlane.xlu0 %969
        %971 = vadd.xlane.f32.xlu0 %v908
        %v972 = vpop.xlane.xlu0 %971
        %973 = vadd.xlane.f32.xlu0 %v910
        %v974 = vpop.xlane.xlu0 %973
        %975 = vadd.xlane.f32.xlu0 %v912
        %v976 = vpop.xlane.xlu0 %975
        %977 = vadd.xlane.f32.xlu0 %v914
        %v978 = vpop.xlane.xlu0 %977
        %979 = vadd.xlane.f32.xlu0 %v916
        %v980 = vpop.xlane.xlu0 %979
        %981 = vadd.xlane.f32.xlu0 %v918
        %v982 = vpop.xlane.xlu0 %981
        %983 = vadd.xlane.f32.xlu0 %v920
        %v984 = vpop.xlane.xlu0 %983
        %985 = vadd.xlane.f32.xlu0 %v922
        %v986 = vpop.xlane.xlu0 %985
        %987 = vadd.xlane.f32.xlu0 %v924
        %v988 = vpop.xlane.xlu0 %987
        %989 = vadd.xlane.f32.xlu0 %v926
        %v990 = vpop.xlane.xlu0 %989
        %991 = vadd.xlane.f32.xlu0 %v928
        %v992 = vpop.xlane.xlu0 %991
        %993 = vadd.xlane.f32.xlu0 %v930
        %v994 = vpop.xlane.xlu0 %993
        %995 = vadd.xlane.f32.xlu0 %v932
        %v996 = vpop.xlane.xlu0 %995
        %v997 = vadd.f32 %v949, %v966
        %v998 = vadd.f32 %v950, %v968
        %v999 = vadd.f32 %v951, %v970
        %v1000 = vadd.f32 %v952, %v972
        %v1001 = vadd.f32 %v953, %v974
        %v1002 = vadd.f32 %v954, %v976
        %v1003 = vadd.f32 %v955, %v978
        %v1004 = vadd.f32 %v956, %v980
        %v1005 = vadd.f32 %v957, %v982
        %v1006 = vadd.f32 %v958, %v984
        %v1007 = vadd.f32 %v959, %v986
        %v1008 = vadd.f32 %v960, %v988
        %v1009 = vadd.f32 %v961, %v990
        %v1010 = vadd.f32 %v962, %v992
        %v1011 = vadd.f32 %v963, %v994
        %v1012 = vadd.f32 %v964, %v996
        %vm1013 = vcmask 7168
        %1014 = vst.msk [vmem:[#allocation4] sm:$0xff] %vm1013, %v997
        %1015 = vst.msk [vmem:[#allocation4 + $0x8] sm:$0xff] %vm1013, %v998
        %1016 = vst.msk [vmem:[#allocation4 + $0x10] sm:$0xff] %vm1013, %v999
        %1017 = vst.msk [vmem:[#allocation4 + $0x18] sm:$0xff] %vm1013, %v1000
        %1018 = vst.msk [vmem:[#allocation4 + $0x20] sm:$0xff] %vm1013, %v1001
        %1019 = vst.msk [vmem:[#allocation4 + $0x28] sm:$0xff] %vm1013, %v1002
        %1020 = vst.msk [vmem:[#allocation4 + $0x30] sm:$0xff] %vm1013, %v1003
        %1021 = vst.msk [vmem:[#allocation4 + $0x38] sm:$0xff] %vm1013, %v1004
        %1022 = vst.msk [vmem:[#allocation4 + $0x40] sm:$0xff] %vm1013, %v1005
        %1023 = vst.msk [vmem:[#allocation4 + $0x48] sm:$0xff] %vm1013, %v1006
        %1024 = vst.msk [vmem:[#allocation4 + $0x50] sm:$0xff] %vm1013, %v1007
        %1025 = vst.msk [vmem:[#allocation4 + $0x58] sm:$0xff] %vm1013, %v1008
        %1026 = vst.msk [vmem:[#allocation4 + $0x60] sm:$0xff] %vm1013, %v1009
        %1027 = vst.msk [vmem:[#allocation4 + $0x68] sm:$0xff] %vm1013, %v1010
        %1028 = vst.msk [vmem:[#allocation4 + $0x70] sm:$0xff] %vm1013, %v1011
        %1029 = vst.msk [vmem:[#allocation4 + $0x78] sm:$0xff] %vm1013, %v1012
        %v1030 = vld [vmem:[#allocation5] sm:$0xff]
        %v1031 = vld [vmem:[#allocation5 + $0x8] sm:$0xff]
        %v1032 = vld [vmem:[#allocation5 + $0x10] sm:$0xff]
        %v1033 = vld [vmem:[#allocation5 + $0x18] sm:$0xff]
        %v1034 = vld [vmem:[#allocation5 + $0x20] sm:$0xff]
        %v1035 = vld [vmem:[#allocation5 + $0x28] sm:$0xff]
        %v1036 = vld [vmem:[#allocation5 + $0x30] sm:$0xff]
        %v1037 = vld [vmem:[#allocation5 + $0x38] sm:$0xff]
        %v1038 = vld [vmem:[#allocation5 + $0x40] sm:$0xff]
        %v1039 = vld [vmem:[#allocation5 + $0x48] sm:$0xff]
        %v1040 = vld [vmem:[#allocation5 + $0x50] sm:$0xff]
        %v1041 = vld [vmem:[#allocation5 + $0x58] sm:$0xff]
        %v1042 = vld [vmem:[#allocation5 + $0x60] sm:$0xff]
        %v1043 = vld [vmem:[#allocation5 + $0x68] sm:$0xff]
        %v1044 = vld [vmem:[#allocation5 + $0x70] sm:$0xff]
        %v1045 = vld [vmem:[#allocation5 + $0x78] sm:$0xff]
        %1047 = vset.pattern.permute.xlu0 0
        %1048 = vperm.xlu0 %1047, %v774
        %v1049 = vpop.permute.xlu0 %1048
        %1052 = vset.pattern.permute.xlu0 0
        %1053 = vperm.xlu0 %1052, %v776
        %v1054 = vpop.permute.xlu0 %1053
        %1057 = vset.pattern.permute.xlu0 0
        %1058 = vperm.xlu0 %1057, %v778
        %v1059 = vpop.permute.xlu0 %1058
        %1062 = vset.pattern.permute.xlu0 0
        %1063 = vperm.xlu0 %1062, %v780
        %v1064 = vpop.permute.xlu0 %1063
        %1067 = vset.pattern.permute.xlu0 0
        %1068 = vperm.xlu0 %1067, %v782
        %v1069 = vpop.permute.xlu0 %1068
        %1072 = vset.pattern.permute.xlu0 0
        %1073 = vperm.xlu0 %1072, %v784
        %v1074 = vpop.permute.xlu0 %1073
        %1077 = vset.pattern.permute.xlu0 0
        %1078 = vperm.xlu0 %1077, %v786
        %v1079 = vpop.permute.xlu0 %1078
        %1082 = vset.pattern.permute.xlu0 0
        %1083 = vperm.xlu0 %1082, %v788
        %v1084 = vpop.permute.xlu0 %1083
        %1087 = vset.pattern.permute.xlu0 0
        %1088 = vperm.xlu0 %1087, %v790
        %v1089 = vpop.permute.xlu0 %1088
        %1092 = vset.pattern.permute.xlu0 0
        %1093 = vperm.xlu0 %1092, %v792
        %v1094 = vpop.permute.xlu0 %1093
        %1097 = vset.pattern.permute.xlu0 0
        %1098 = vperm.xlu0 %1097, %v794
        %v1099 = vpop.permute.xlu0 %1098
        %1102 = vset.pattern.permute.xlu0 0
        %1103 = vperm.xlu0 %1102, %v796
        %v1104 = vpop.permute.xlu0 %1103
        %1107 = vset.pattern.permute.xlu0 0
        %1108 = vperm.xlu0 %1107, %v798
        %v1109 = vpop.permute.xlu0 %1108
        %1112 = vset.pattern.permute.xlu0 0
        %1113 = vperm.xlu0 %1112, %v800
        %v1114 = vpop.permute.xlu0 %1113
        %1117 = vset.pattern.permute.xlu0 0
        %1118 = vperm.xlu0 %1117, %v802
        %v1119 = vpop.permute.xlu0 %1118
        %1122 = vset.pattern.permute.xlu0 0
        %1123 = vperm.xlu0 %1122, %v804
        %v1124 = vpop.permute.xlu0 %1123
        %v1126 = vmul.f32 %v1049, %v1030
        %v1127 = vmul.f32 %v1054, %v1031
        %v1128 = vmul.f32 %v1059, %v1032
        %v1129 = vmul.f32 %v1064, %v1033
        %v1130 = vmul.f32 %v1069, %v1034
        %v1131 = vmul.f32 %v1074, %v1035
        %v1132 = vmul.f32 %v1079, %v1036
        %v1133 = vmul.f32 %v1084, %v1037
        %v1134 = vmul.f32 %v1089, %v1038
        %v1135 = vmul.f32 %v1094, %v1039
        %v1136 = vmul.f32 %v1099, %v1040
        %v1137 = vmul.f32 %v1104, %v1041
        %v1138 = vmul.f32 %v1109, %v1042
        %v1139 = vmul.f32 %v1114, %v1043
        %v1140 = vmul.f32 %v1119, %v1044
        %v1141 = vmul.f32 %v1124, %v1045
        %1142 = vmatprep.subr.mxu0 0.0
        %1143 = vmatpush1.msra.mxu0 %v413
        %1144 = vmatprep.subr.mxu0 0.0
        %1145 = vmatpush1.msra.mxu0 %v414
        %1146 = vmatprep.subr.mxu0 0.0
        %1147 = vmatpush1.msra.mxu0 %v415
        %1148 = vmatprep.subr.mxu0 0.0
        %1149 = vmatpush1.msra.mxu0 %v416
        %1150 = vmatprep.subr.mxu0 0.0
        %1151 = vmatpush1.msra.mxu0 %v417
        %1152 = vmatprep.subr.mxu0 0.0
        %1153 = vmatpush1.msra.mxu0 %v418
        %1154 = vmatprep.subr.mxu0 0.0
        %1155 = vmatpush1.msra.mxu0 %v419
        %1156 = vmatprep.subr.mxu0 0.0
        %1157 = vmatpush1.msra.mxu0 %v420
        %1158 = vmatprep.subr.mxu0 0.0
        %1159 = vmatpush1.msra.mxu0 %v421
        %1160 = vmatprep.subr.mxu0 0.0
        %1161 = vmatpush1.msra.mxu0 %v422
        %1162 = vmatprep.subr.mxu0 0.0
        %1163 = vmatpush1.msra.mxu0 %v423
        %1164 = vmatprep.subr.mxu0 0.0
        %1165 = vmatpush1.msra.mxu0 %v424
        %1166 = vmatprep.subr.mxu0 0.0
        %1167 = vmatpush1.msra.mxu0 %v425
        %1168 = vmatprep.subr.mxu0 0.0
        %1169 = vmatpush1.msra.mxu0 %v426
        %1170 = vmatprep.subr.mxu0 0.0
        %1171 = vmatpush1.msra.mxu0 %v427
        %1172 = vmatprep.subr.mxu0 0.0
        %1173 = vmatpush1.msra.mxu0 %v428
        %1174 = vmatprep.subr.mxu0 0.0
        %1175 = vmatpush1.msra.mxu0 0.0
        %1176 = vmatprep.subr.mxu0 0.0
        %1177 = vmatpush1.msra.mxu0 0.0
        %1178 = vmatprep.subr.mxu0 0.0
        %1179 = vmatpush1.msra.mxu0 0.0
        %1180 = vmatprep.subr.mxu0 0.0
        %1181 = vmatpush1.msra.mxu0 0.0
        %1182 = vmatprep.subr.mxu0 0.0
        %1183 = vmatpush1.msra.mxu0 0.0
        %1184 = vmatprep.subr.mxu0 0.0
        %1185 = vmatpush1.msra.mxu0 0.0
        %1186 = vmatprep.subr.mxu0 0.0
        %1187 = vmatpush1.msra.mxu0 0.0
        %1188 = vmatprep.subr.mxu0 0.0
        %1189 = vmatpush1.msra.mxu0 0.0
        %1190 = vmatprep.subr.mxu0 0.0
        %1191 = vmatpush1.msra.mxu0 0.0
        %1192 = vmatprep.subr.mxu0 0.0
        %1193 = vmatpush1.msra.mxu0 0.0
        %1194 = vmatprep.subr.mxu0 0.0
        %1195 = vmatpush1.msra.mxu0 0.0
        %1196 = vmatprep.subr.mxu0 0.0
        %1197 = vmatpush1.msra.mxu0 0.0
        %1198 = vmatprep.subr.mxu0 0.0
        %1199 = vmatpush1.msra.mxu0 0.0
        %1200 = vmatprep.subr.mxu0 0.0
        %1201 = vmatpush1.msra.mxu0 0.0
        %1202 = vmatprep.subr.mxu0 0.0
        %1203 = vmatpush1.msra.mxu0 0.0
        %1204 = vmatprep.subr.mxu0 0.0
        %1205 = vmatpush1.msra.mxu0 0.0
        %1206 = vmatprep.mubr.f32.mxu0 0.0
        %1207 = vmatmul.mubr.f32.gmra.mrb[0].mxu0 %v902
        %v1208 = vpop.f32.mrb[0].mxu0
        %v1209 = vadd.f32 0.0, %v1208
        %v1210 = vpop.f32.mrb[0].mxu0
        %1211 = vmatprep.mubr.f32.mxu0 0.0
        %1212 = vmatmul.mubr.f32.gmra.mrb[0].mxu0 %v904
        %v1213 = vpop.f32.mrb[0].mxu0
        %v1214 = vadd.f32 0.0, %v1213
        %v1215 = vpop.f32.mrb[0].mxu0
        %1216 = vmatprep.mubr.f32.mxu0 0.0
        %1217 = vmatmul.mubr.f32.gmra.mrb[0].mxu0 %v906
        %v1218 = vpop.f32.mrb[0].mxu0
        %v1219 = vadd.f32 0.0, %v1218
        %v1220 = vpop.f32.mrb[0].mxu0
        %1221 = vmatprep.mubr.f32.mxu0 0.0
        %1222 = vmatmul.mubr.f32.gmra.mrb[0].mxu0 %v908
        %v1223 = vpop.f32.mrb[0].mxu0
        %v1224 = vadd.f32 0.0, %v1223
        %v1225 = vpop.f32.mrb[0].mxu0
        %1226 = vmatprep.mubr.f32.mxu0 0.0
        %1227 = vmatmul.mubr.f32.gmra.mrb[0].mxu0 %v910
        %v1228 = vpop.f32.mrb[0].mxu0
        %v1229 = vadd.f32 0.0, %v1228
        %v1230 = vpop.f32.mrb[0].mxu0
        %1231 = vmatprep.mubr.f32.mxu0 0.0
        %1232 = vmatmul.mubr.f32.gmra.mrb[0].mxu0 %v912
        %v1233 = vpop.f32.mrb[0].mxu0
        %v1234 = vadd.f32 0.0, %v1233
        %v1235 = vpop.f32.mrb[0].mxu0
        %1236 = vmatprep.mubr.f32.mxu0 0.0
        %1237 = vmatmul.mubr.f32.gmra.mrb[0].mxu0 %v914
        %v1238 = vpop.f32.mrb[0].mxu0
        %v1239 = vadd.f32 0.0, %v1238
        %v1240 = vpop.f32.mrb[0].mxu0
        %1241 = vmatprep.mubr.f32.mxu0 0.0
        %1242 = vmatmul.mubr.f32.gmra.mrb[0].mxu0 %v916
        %v1243 = vpop.f32.mrb[0].mxu0
        %v1244 = vadd.f32 0.0, %v1243
        %v1245 = vpop.f32.mrb[0].mxu0
        %1246 = vmatprep.mubr.f32.mxu0 0.0
        %1247 = vmatmul.mubr.f32.gmra.mrb[0].mxu0 %v918
        %v1248 = vpop.f32.mrb[0].mxu0
        %v1249 = vadd.f32 0.0, %v1248
        %v1250 = vpop.f32.mrb[0].mxu0
        %1251 = vmatprep.mubr.f32.mxu0 0.0
        %1252 = vmatmul.mubr.f32.gmra.mrb[0].mxu0 %v920
        %v1253 = vpop.f32.mrb[0].mxu0
        %v1254 = vadd.f32 0.0, %v1253
        %v1255 = vpop.f32.mrb[0].mxu0
        %1256 = vmatprep.mubr.f32.mxu0 0.0
        %1257 = vmatmul.mubr.f32.gmra.mrb[0].mxu0 %v922
        %v1258 = vpop.f32.mrb[0].mxu0
        %v1259 = vadd.f32 0.0, %v1258
        %v1260 = vpop.f32.mrb[0].mxu0
        %1261 = vmatprep.mubr.f32.mxu0 0.0
        %1262 = vmatmul.mubr.f32.gmra.mrb[0].mxu0 %v924
        %v1263 = vpop.f32.mrb[0].mxu0
        %v1264 = vadd.f32 0.0, %v1263
        %v1265 = vpop.f32.mrb[0].mxu0
        %1266 = vmatprep.mubr.f32.mxu0 0.0
        %1267 = vmatmul.mubr.f32.gmra.mrb[0].mxu0 %v926
        %v1268 = vpop.f32.mrb[0].mxu0
        %v1269 = vadd.f32 0.0, %v1268
        %v1270 = vpop.f32.mrb[0].mxu0
        %1271 = vmatprep.mubr.f32.mxu0 0.0
        %1272 = vmatmul.mubr.f32.gmra.mrb[0].mxu0 %v928
        %v1273 = vpop.f32.mrb[0].mxu0
        %v1274 = vadd.f32 0.0, %v1273
        %v1275 = vpop.f32.mrb[0].mxu0
        %1276 = vmatprep.mubr.f32.mxu0 0.0
        %1277 = vmatmul.mubr.f32.gmra.mrb[0].mxu0 %v930
        %v1278 = vpop.f32.mrb[0].mxu0
        %v1279 = vadd.f32 0.0, %v1278
        %v1280 = vpop.f32.mrb[0].mxu0
        %1281 = vmatprep.mubr.f32.mxu0 0.0
        %1282 = vmatmul.mubr.f32.gmra.mrb[0].mxu0 %v932
        %v1283 = vpop.f32.mrb[0].mxu0
        %v1284 = vadd.f32 0.0, %v1283
        %v1285 = vpop.f32.mrb[0].mxu0
        %1286 = vdwg.mxu0
        %v1287 = vadd.f32 %v1126, %v1209
        %v1288 = vadd.f32 %v1127, %v1214
        %v1289 = vadd.f32 %v1128, %v1219
        %v1290 = vadd.f32 %v1129, %v1224
        %v1291 = vadd.f32 %v1130, %v1229
        %v1292 = vadd.f32 %v1131, %v1234
        %v1293 = vadd.f32 %v1132, %v1239
        %v1294 = vadd.f32 %v1133, %v1244
        %v1295 = vadd.f32 %v1134, %v1249
        %v1296 = vadd.f32 %v1135, %v1254
        %v1297 = vadd.f32 %v1136, %v1259
        %v1298 = vadd.f32 %v1137, %v1264
        %v1299 = vadd.f32 %v1138, %v1269
        %v1300 = vadd.f32 %v1139, %v1274
        %v1301 = vadd.f32 %v1140, %v1279
        %v1302 = vadd.f32 %v1141, %v1284
        %1303 = vst [vmem:[#allocation5] sm:$0xff] %v1287
        %1304 = vst [vmem:[#allocation5 + $0x8] sm:$0xff] %v1288
        %1305 = vst [vmem:[#allocation5 + $0x10] sm:$0xff] %v1289
        %1306 = vst [vmem:[#allocation5 + $0x18] sm:$0xff] %v1290
        %1307 = vst [vmem:[#allocation5 + $0x20] sm:$0xff] %v1291
        %1308 = vst [vmem:[#allocation5 + $0x28] sm:$0xff] %v1292
        %1309 = vst [vmem:[#allocation5 + $0x30] sm:$0xff] %v1293
        %1310 = vst [vmem:[#allocation5 + $0x38] sm:$0xff] %v1294
        %1311 = vst [vmem:[#allocation5 + $0x40] sm:$0xff] %v1295
        %1312 = vst [vmem:[#allocation5 + $0x48] sm:$0xff] %v1296
        %1313 = vst [vmem:[#allocation5 + $0x50] sm:$0xff] %v1297
        %1314 = vst [vmem:[#allocation5 + $0x58] sm:$0xff] %v1298
        %1315 = vst [vmem:[#allocation5 + $0x60] sm:$0xff] %v1299
        %1316 = vst [vmem:[#allocation5 + $0x68] sm:$0xff] %v1300
        %1317 = vst [vmem:[#allocation5 + $0x70] sm:$0xff] %v1301
        %1318 = vst [vmem:[#allocation5 + $0x78] sm:$0xff] %v1302
        %1319 = vst.msk [vmem:[#allocation3] sm:$0xff] %vm1013, %v741
        %1320 = vst.msk [vmem:[#allocation3 + $0x8] sm:$0xff] %vm1013, %v742
        %1321 = vst.msk [vmem:[#allocation3 + $0x10] sm:$0xff] %vm1013, %v743
        %1322 = vst.msk [vmem:[#allocation3 + $0x18] sm:$0xff] %vm1013, %v744
        %1323 = vst.msk [vmem:[#allocation3 + $0x20] sm:$0xff] %vm1013, %v745
        %1324 = vst.msk [vmem:[#allocation3 + $0x28] sm:$0xff] %vm1013, %v746
        %1325 = vst.msk [vmem:[#allocation3 + $0x30] sm:$0xff] %vm1013, %v747
        %1326 = vst.msk [vmem:[#allocation3 + $0x38] sm:$0xff] %vm1013, %v748
        %1327 = vst.msk [vmem:[#allocation3 + $0x40] sm:$0xff] %vm1013, %v749
        %1328 = vst.msk [vmem:[#allocation3 + $0x48] sm:$0xff] %vm1013, %v750
        %1329 = vst.msk [vmem:[#allocation3 + $0x50] sm:$0xff] %vm1013, %v751
        %1330 = vst.msk [vmem:[#allocation3 + $0x58] sm:$0xff] %vm1013, %v752
        %1331 = vst.msk [vmem:[#allocation3 + $0x60] sm:$0xff] %vm1013, %v753
        %1332 = vst.msk [vmem:[#allocation3 + $0x68] sm:$0xff] %vm1013, %v754
        %1333 = vst.msk [vmem:[#allocation3 + $0x70] sm:$0xff] %vm1013, %v755
        %1334 = vst.msk [vmem:[#allocation3 + $0x78] sm:$0xff] %vm1013, %v756
        %p1335 = scmp.eq.s32.totalorder %s24, 2
        // Predicated region
        $region37: #{tpu_custom_call.1} parent=31 // pred_check
          %p1336 = pneg %p1335
        $region38: #{tpu_custom_call.1} parent=31 // pred_check_branch
          %1338 = sbr.rel (%p1336) target = $region40
        $region39: #{tpu_custom_call.1} parent=31 // pred_region
          %v1339 = vld [vmem:[#allocation4] sm:$0xff]
          %v1340 = vld [vmem:[#allocation4 + $0x8] sm:$0xff]
          %v1341 = vld [vmem:[#allocation4 + $0x10] sm:$0xff]
          %v1342 = vld [vmem:[#allocation4 + $0x18] sm:$0xff]
          %v1343 = vld [vmem:[#allocation4 + $0x20] sm:$0xff]
          %v1344 = vld [vmem:[#allocation4 + $0x28] sm:$0xff]
          %v1345 = vld [vmem:[#allocation4 + $0x30] sm:$0xff]
          %v1346 = vld [vmem:[#allocation4 + $0x38] sm:$0xff]
          %v1347 = vld [vmem:[#allocation4 + $0x40] sm:$0xff]
          %v1348 = vld [vmem:[#allocation4 + $0x48] sm:$0xff]
          %v1349 = vld [vmem:[#allocation4 + $0x50] sm:$0xff]
          %v1350 = vld [vmem:[#allocation4 + $0x58] sm:$0xff]
          %v1351 = vld [vmem:[#allocation4 + $0x60] sm:$0xff]
          %v1352 = vld [vmem:[#allocation4 + $0x68] sm:$0xff]
          %v1353 = vld [vmem:[#allocation4 + $0x70] sm:$0xff]
          %v1354 = vld [vmem:[#allocation4 + $0x78] sm:$0xff]
          %v1355 = vrcp.pop %v1339
          %v1356 = vrcp.pop %v1340
          %v1357 = vrcp.pop %v1341
          %v1358 = vrcp.pop %v1342
          %v1359 = vrcp.pop %v1343
          %v1360 = vrcp.pop %v1344
          %v1361 = vrcp.pop %v1345
          %v1362 = vrcp.pop %v1346
          %v1363 = vrcp.pop %v1347
          %v1364 = vrcp.pop %v1348
          %v1365 = vrcp.pop %v1349
          %v1366 = vrcp.pop %v1350
          %v1367 = vrcp.pop %v1351
          %v1368 = vrcp.pop %v1352
          %v1369 = vrcp.pop %v1353
          %v1370 = vrcp.pop %v1354
          %v1371 = vld [vmem:[#allocation5] sm:$0xff]
          %v1372 = vld [vmem:[#allocation5 + $0x8] sm:$0xff]
          %v1373 = vld [vmem:[#allocation5 + $0x10] sm:$0xff]
          %v1374 = vld [vmem:[#allocation5 + $0x18] sm:$0xff]
          %v1375 = vld [vmem:[#allocation5 + $0x20] sm:$0xff]
          %v1376 = vld [vmem:[#allocation5 + $0x28] sm:$0xff]
          %v1377 = vld [vmem:[#allocation5 + $0x30] sm:$0xff]
          %v1378 = vld [vmem:[#allocation5 + $0x38] sm:$0xff]
          %v1379 = vld [vmem:[#allocation5 + $0x40] sm:$0xff]
          %v1380 = vld [vmem:[#allocation5 + $0x48] sm:$0xff]
          %v1381 = vld [vmem:[#allocation5 + $0x50] sm:$0xff]
          %v1382 = vld [vmem:[#allocation5 + $0x58] sm:$0xff]
          %v1383 = vld [vmem:[#allocation5 + $0x60] sm:$0xff]
          %v1384 = vld [vmem:[#allocation5 + $0x68] sm:$0xff]
          %v1385 = vld [vmem:[#allocation5 + $0x70] sm:$0xff]
          %v1386 = vld [vmem:[#allocation5 + $0x78] sm:$0xff]
          %1388 = vset.pattern.permute.xlu0 0
          %1389 = vperm.xlu0 %1388, %v1355
          %v1390 = vpop.permute.xlu0 %1389
          %1393 = vset.pattern.permute.xlu0 0
          %1394 = vperm.xlu0 %1393, %v1356
          %v1395 = vpop.permute.xlu0 %1394
          %1398 = vset.pattern.permute.xlu0 0
          %1399 = vperm.xlu0 %1398, %v1357
          %v1400 = vpop.permute.xlu0 %1399
          %1403 = vset.pattern.permute.xlu0 0
          %1404 = vperm.xlu0 %1403, %v1358
          %v1405 = vpop.permute.xlu0 %1404
          %1408 = vset.pattern.permute.xlu0 0
          %1409 = vperm.xlu0 %1408, %v1359
          %v1410 = vpop.permute.xlu0 %1409
          %1413 = vset.pattern.permute.xlu0 0
          %1414 = vperm.xlu0 %1413, %v1360
          %v1415 = vpop.permute.xlu0 %1414
          %1418 = vset.pattern.permute.xlu0 0
          %1419 = vperm.xlu0 %1418, %v1361
          %v1420 = vpop.permute.xlu0 %1419
          %1423 = vset.pattern.permute.xlu0 0
          %1424 = vperm.xlu0 %1423, %v1362
          %v1425 = vpop.permute.xlu0 %1424
          %1428 = vset.pattern.permute.xlu0 0
          %1429 = vperm.xlu0 %1428, %v1363
          %v1430 = vpop.permute.xlu0 %1429
          %1433 = vset.pattern.permute.xlu0 0
          %1434 = vperm.xlu0 %1433, %v1364
          %v1435 = vpop.permute.xlu0 %1434
          %1438 = vset.pattern.permute.xlu0 0
          %1439 = vperm.xlu0 %1438, %v1365
          %v1440 = vpop.permute.xlu0 %1439
          %1443 = vset.pattern.permute.xlu0 0
          %1444 = vperm.xlu0 %1443, %v1366
          %v1445 = vpop.permute.xlu0 %1444
          %1448 = vset.pattern.permute.xlu0 0
          %1449 = vperm.xlu0 %1448, %v1367
          %v1450 = vpop.permute.xlu0 %1449
          %1453 = vset.pattern.permute.xlu0 0
          %1454 = vperm.xlu0 %1453, %v1368
          %v1455 = vpop.permute.xlu0 %1454
          %1458 = vset.pattern.permute.xlu0 0
          %1459 = vperm.xlu0 %1458, %v1369
          %v1460 = vpop.permute.xlu0 %1459
          %1463 = vset.pattern.permute.xlu0 0
          %1464 = vperm.xlu0 %1463, %v1370
          %v1465 = vpop.permute.xlu0 %1464
          %v1467 = vmul.f32 %v1371, %v1390
          %v1468 = vmul.f32 %v1372, %v1395
          %v1469 = vmul.f32 %v1373, %v1400
          %v1470 = vmul.f32 %v1374, %v1405
          %v1471 = vmul.f32 %v1375, %v1410
          %v1472 = vmul.f32 %v1376, %v1415
          %v1473 = vmul.f32 %v1377, %v1420
          %v1474 = vmul.f32 %v1378, %v1425
          %v1475 = vmul.f32 %v1379, %v1430
          %v1476 = vmul.f32 %v1380, %v1435
          %v1477 = vmul.f32 %v1381, %v1440
          %v1478 = vmul.f32 %v1382, %v1445
          %v1479 = vmul.f32 %v1383, %v1450
          %v1480 = vmul.f32 %v1384, %v1455
          %v1481 = vmul.f32 %v1385, %v1460
          %v1482 = vmul.f32 %v1386, %v1465
          %1483 = vst [vmem:[%s247] sm:$0xff] %v1467
          %1484 = vst [vmem:[%s247 + $0x8] sm:$0xff] %v1468
          %1485 = vst [vmem:[%s247 + $0x10] sm:$0xff] %v1469
          %1486 = vst [vmem:[%s247 + $0x18] sm:$0xff] %v1470
          %1487 = vst [vmem:[%s247 + $0x20] sm:$0xff] %v1471
          %1488 = vst [vmem:[%s247 + $0x28] sm:$0xff] %v1472
          %1489 = vst [vmem:[%s247 + $0x30] sm:$0xff] %v1473
          %1490 = vst [vmem:[%s247 + $0x38] sm:$0xff] %v1474
          %1491 = vst [vmem:[%s247 + $0x40] sm:$0xff] %v1475
          %1492 = vst [vmem:[%s247 + $0x48] sm:$0xff] %v1476
          %1493 = vst [vmem:[%s247 + $0x50] sm:$0xff] %v1477
          %1494 = vst [vmem:[%s247 + $0x58] sm:$0xff] %v1478
          %1495 = vst [vmem:[%s247 + $0x60] sm:$0xff] %v1479
          %1496 = vst [vmem:[%s247 + $0x68] sm:$0xff] %v1480
          %1497 = vst [vmem:[%s247 + $0x70] sm:$0xff] %v1481
          %1498 = vst [vmem:[%s247 + $0x78] sm:$0xff] %v1482
        $region40: #{tpu_custom_call.1} parent=31 // pred_fallthru
          _
        %s1499 = sand.u32 %s130, 1
        %s1500 = scalar_lea.sflag [#allocation7], %s1499
        %s1501 = sand.u32 %s130, 1
        %s1502 = smul.addr %s1501, 128
        %s1503 = scalar_lea.vmem [#allocation6], %s1502
        // Predicated region
        $region41: #{tpu_custom_call.1} parent=31 // pred_check
          %p1504 = pneg %p140
        $region42: #{tpu_custom_call.1} parent=31 // pred_check_branch
          %1506 = sbr.rel (%p1504) target = $region44
        $region43: #{tpu_custom_call.1} parent=31 // pred_region
          %s1507 = smul.u32 16, %s23
          %s1509 = ssub.s32 2048, 2048
          %1510 = vsyncadd %s1500, %s1509
          %s1511 = smul.addr %s22, 32
          %s1512 = sadd.s32 %s1507, %s1511
          %s1513 = smul.addr %s1512, 128
          %s1514 = scalar_lea.hbm %s3, %s1513
          %s1515 = sshll.u32 %s1503, 4
          %s1516 = int_to_ptr.vmem [resolvable:$true] %s1515
          %1521 = dma.vmem_to_hbm [thread:$0]  %s1516, 2048, %s1514, %s1500, 128, 128, 8
        $region44: #{tpu_custom_call.1} parent=31 // pred_fallthru
          _
      $region32: #{tpu_custom_call.1} parent=5 // pred_fallthru
        _
      %p1522 = scmp.le.s32.totalorder 2, %s12
      // Predicated region
      $region45: #{tpu_custom_call.1} parent=5 // pred_check
        %p1523 = pneg %p1522
      $region46: #{tpu_custom_call.1} parent=5 // pred_check_branch
        %1525 = sbr.rel (%p1523) target = $region48
      $region47: #{tpu_custom_call.1} parent=5 // pred_region
        %s1526 = ssub.s32 %s12, 2
        // Predicated region
        $region49: #{tpu_custom_call.1} parent=47 // pred_check
          %p1527 = pneg %p146
        $region50: #{tpu_custom_call.1} parent=47 // pred_check_branch
          %1529 = sbr.rel (%p1527) target = $region52
        $region51: #{tpu_custom_call.1} parent=47 // pred_region
          %s1530 = sand.u32 %s131, 1
          %s1531 = scalar_lea.sflag [#allocation7], %s1530
          %s1532 = sand.u32 %s131, 1
          %s1533 = smul.addr %s1532, 128
          %s1534 = scalar_lea.vmem [#allocation6], %s1533
          %1535 = dma.done %s1531, 2048
        $region52: #{tpu_custom_call.1} parent=47 // pred_fallthru
          _
      $region48: #{tpu_custom_call.1} parent=5 // pred_fallthru
        _
    $region6: #{tpu_custom_call.1} parent=1 // loop_footer
      %s16 = sadd.s32 1, %s12
    $region7: #{tpu_custom_call.1} parent=1 // loop_footer_branch
      %11 = sbr.rel target = $region3
    $region8: #{tpu_custom_call.1} parent=1 // loop_exit
      _
    %1536 = vsyncpa [#allocation7], 1
    %s1537 = scalar_lea.sflag [#allocation7], 1
    %1538 = vsyncpa %s1537, 1

</llo_original>
